<compile_context>
chip_gen: v7x
topology: tpu7x:2x2x1
jax: 0.10.0
libtpu: 0.0.40
codegen_flags: <defaults>
</compile_context>

<pallas_src>
import jax
import jax.numpy as jnp
from jax.experimental import pallas as pl
from jax.experimental.pallas import tpu as pltpu

IN_DIM = 3 * 32 * 32   # 3072
H1 = 32
H2 = 24
OUT_DIM = 10

# 1024-row tiles sit at ~86% of the HBM roofline (vs ~85% at 512) and the
# double-buffered working set (~25 MiB) fits every TPU generation given the
# 48 MiB scoped-VMEM limit requested below.
DEFAULT_BLOCK_B = 1024


def mlp_kernel(x_ref, w1_ref, b1_ref, w2_ref, b2_ref, w3_ref, b3_ref, o_ref):
    # One (TB, IN_DIM) batch tile; all weights/biases are VMEM-resident blocks.
    x = x_ref[...]
    h = jnp.dot(x, w1_ref[...], preferred_element_type=jnp.float32) + b1_ref[...]
    h = jnp.dot(h, w2_ref[...], preferred_element_type=jnp.float32) + b2_ref[...]
    h = jnp.dot(h, w3_ref[...], preferred_element_type=jnp.float32) + b3_ref[...]
    o_ref[...] = h.astype(o_ref.dtype)


def mlp_forward(x, w1, b1, w2, b2, w3, b3, *, block_b=DEFAULT_BLOCK_B):
    B = x.shape[0]
    TB = min(block_b, B)
    grid = (pl.cdiv(B, TB),)

    # Biases as (1, N) rows so they broadcast cleanly on TPU.
    b1_2d = b1.reshape(1, H1)
    b2_2d = b2.reshape(1, H2)
    b3_2d = b3.reshape(1, OUT_DIM)

    # x / out tiles march along the batch; weights use a constant index_map so
    # the same block is reused (single DMA) for every grid step.
    x_spec = pl.BlockSpec((TB, IN_DIM), lambda i: (i, 0))
    out_spec = pl.BlockSpec((TB, OUT_DIM), lambda i: (i, 0))
    const = lambda shape: pl.BlockSpec(shape, lambda i: (0, 0))

    flops = 2 * B * (IN_DIM * H1 + H1 * H2 + H2 * OUT_DIM)
    bytes_accessed = 4 * (
        B * IN_DIM + B * OUT_DIM
        + IN_DIM * H1 + H1 * H2 + H2 * OUT_DIM
        + H1 + H2 + OUT_DIM
    )

    return pl.pallas_call(
        mlp_kernel,
        out_shape=jax.ShapeDtypeStruct((B, OUT_DIM), jnp.float32),
        grid=grid,
        in_specs=[
            x_spec,
            const((IN_DIM, H1)),
            const((1, H1)),
            const((H1, H2)),
            const((1, H2)),
            const((H2, OUT_DIM)),
            const((1, OUT_DIM)),
        ],
        out_specs=out_spec,
        compiler_params=pltpu.CompilerParams(
            dimension_semantics=("parallel",),      # megacore sharding on v7x
            vmem_limit_bytes=48 * 1024 * 1024,      # fits v5e scoped & v7x physical
        ),
        cost_estimate=pl.CostEstimate(
            flops=flops, transcendentals=0, bytes_accessed=bytes_accessed
        ),
    )(x, w1, b1_2d, w2, b2_2d, w3, b3_2d)


def init_params(key):
    """nn.Linear-style init (uniform +- 1/sqrt(fan_in)); weights stored as
    (in_features, out_features), i.e. transposed vs. PyTorch."""
    ks = jax.random.split(key, 6)

    def linear(kw, kb, fan_in, fan_out):
        bound = 1.0 / jnp.sqrt(fan_in)
        w = jax.random.uniform(kw, (fan_in, fan_out), jnp.float32, -bound, bound)
        b = jax.random.uniform(kb, (fan_out,), jnp.float32, -bound, bound)
        return w, b

    w1, b1 = linear(ks[0], ks[1], IN_DIM, H1)
    w2, b2 = linear(ks[2], ks[3], H1, H2)
    w3, b3 = linear(ks[4], ks[5], H2, OUT_DIM)
    return w1, b1, w2, b2, w3, b3


def _reference(x, params):
    w1, b1, w2, b2, w3, b3 = params
    return ((x @ w1 + b1) @ w2 + b2) @ w3 + b3


if __name__ == "__main__":
    key = jax.random.PRNGKey(0)
    k_x, k_x2, k_p = jax.random.split(key, 3)
    params = init_params(k_p)

    # Small-shape check (single grid step, partial tile TB == B == 2).
    B = 2
    x = jax.random.normal(k_x, (B, IN_DIM), jnp.float32)
    out = jax.block_until_ready(mlp_forward(x, *params))
    ref = _reference(x, params)
    assert out.shape == (B, OUT_DIM)
    assert jnp.allclose(out, ref, atol=1e-4, rtol=1e-4)

    # Multi-tile check: exercises the batch grid / pipelined path (grid=(2,)).
    B2 = 16
    x2 = jax.random.normal(k_x2, (B2, IN_DIM), jnp.float32)
    out2 = jax.block_until_ready(mlp_forward(x2, *params, block_b=8))
    ref2 = _reference(x2, params)
    assert out2.shape == (B2, OUT_DIM)
    assert jnp.allclose(out2, ref2, atol=1e-4, rtol=1e-4)

    print("KERNEL_OK")
</pallas_src>

<mosaic_0001>
module attributes {stable_mosaic.version = 11 : i64} {
  func.func @mlp_kernel(%arg0: i32, %arg1: memref<2x3072xf32, #tpu.memory_space<vmem>>, %arg2: memref<3072x32xf32, #tpu.memory_space<vmem>>, %arg3: memref<1x32xf32, #tpu.memory_space<vmem>>, %arg4: memref<32x24xf32, #tpu.memory_space<vmem>>, %arg5: memref<1x24xf32, #tpu.memory_space<vmem>>, %arg6: memref<24x10xf32, #tpu.memory_space<vmem>>, %arg7: memref<1x10xf32, #tpu.memory_space<vmem>>, %arg8: memref<2x10xf32, #tpu.memory_space<vmem>>) attributes {dimension_semantics = [#tpu.dimension_semantics<parallel>], iteration_bounds = array<i64: 1>, scalar_prefetch = 0 : i64, scratch_operands = 0 : i64, tpu.core_type = #tpu.core_type<tc>, window_params = [{transform_indices = @transform_0, window_bounds = array<i64: 2, 3072>}, {pipeline_mode = #tpu.pipeline_mode<synchronous>, transform_indices = @transform_1, window_bounds = array<i64: 3072, 32>}, {pipeline_mode = #tpu.pipeline_mode<synchronous>, transform_indices = @transform_2, window_bounds = array<i64: 1, 32>}, {pipeline_mode = #tpu.pipeline_mode<synchronous>, transform_indices = @transform_3, window_bounds = array<i64: 32, 24>}, {pipeline_mode = #tpu.pipeline_mode<synchronous>, transform_indices = @transform_4, window_bounds = array<i64: 1, 24>}, {pipeline_mode = #tpu.pipeline_mode<synchronous>, transform_indices = @transform_5, window_bounds = array<i64: 24, 10>}, {pipeline_mode = #tpu.pipeline_mode<synchronous>, transform_indices = @transform_6, window_bounds = array<i64: 1, 10>}, {transform_indices = @transform_7, window_bounds = array<i64: 2, 10>}]} {
    %c0 = arith.constant 0 : index
    %c0_0 = arith.constant 0 : index
    %0 = vector.load %arg1[%c0, %c0_0] : memref<2x3072xf32, #tpu.memory_space<vmem>>, vector<2x3072xf32>
    %c0_1 = arith.constant 0 : index
    %c0_2 = arith.constant 0 : index
    %1 = vector.load %arg2[%c0_1, %c0_2] : memref<3072x32xf32, #tpu.memory_space<vmem>>, vector<3072x32xf32>
    %cst = arith.constant dense<0.000000e+00> : vector<2x32xf32>
    %2 = tpu.matmul %0, %1, %cst {dimension_numbers = #tpu.dot_dimension_numbers<[1], [0], [0], [1], [0, 0, 1, 1], [], []>} : vector<2x3072xf32>, vector<3072x32xf32>, vector<2x32xf32> -> vector<2x32xf32>
    %c0_3 = arith.constant 0 : index
    %c0_4 = arith.constant 0 : index
    %3 = vector.load %arg3[%c0_3, %c0_4] : memref<1x32xf32, #tpu.memory_space<vmem>>, vector<1x32xf32>
    %4 = vector.broadcast %3 : vector<1x32xf32> to vector<2x32xf32>
    %5 = arith.addf %2, %4 : vector<2x32xf32>
    %c0_5 = arith.constant 0 : index
    %c0_6 = arith.constant 0 : index
    %6 = vector.load %arg4[%c0_5, %c0_6] : memref<32x24xf32, #tpu.memory_space<vmem>>, vector<32x24xf32>
    %cst_7 = arith.constant dense<0.000000e+00> : vector<2x24xf32>
    %7 = tpu.matmul %5, %6, %cst_7 {dimension_numbers = #tpu.dot_dimension_numbers<[1], [0], [0], [1], [0, 0, 1, 1], [], []>} : vector<2x32xf32>, vector<32x24xf32>, vector<2x24xf32> -> vector<2x24xf32>
    %c0_8 = arith.constant 0 : index
    %c0_9 = arith.constant 0 : index
    %8 = vector.load %arg5[%c0_8, %c0_9] : memref<1x24xf32, #tpu.memory_space<vmem>>, vector<1x24xf32>
    %9 = vector.broadcast %8 : vector<1x24xf32> to vector<2x24xf32>
    %10 = arith.addf %7, %9 : vector<2x24xf32>
    %c0_10 = arith.constant 0 : index
    %c0_11 = arith.constant 0 : index
    %11 = vector.load %arg6[%c0_10, %c0_11] : memref<24x10xf32, #tpu.memory_space<vmem>>, vector<24x10xf32>
    %cst_12 = arith.constant dense<0.000000e+00> : vector<2x10xf32>
    %12 = tpu.matmul %10, %11, %cst_12 {dimension_numbers = #tpu.dot_dimension_numbers<[1], [0], [0], [1], [0, 0, 1, 1], [], []>} : vector<2x24xf32>, vector<24x10xf32>, vector<2x10xf32> -> vector<2x10xf32>
    %c0_13 = arith.constant 0 : index
    %c0_14 = arith.constant 0 : index
    %13 = vector.load %arg7[%c0_13, %c0_14] : memref<1x10xf32, #tpu.memory_space<vmem>>, vector<1x10xf32>
    %14 = vector.broadcast %13 : vector<1x10xf32> to vector<2x10xf32>
    %15 = arith.addf %12, %14 : vector<2x10xf32>
    %c0_15 = arith.constant 0 : index
    %c0_16 = arith.constant 0 : index
    %16 = vector.load %arg8[%c0_15, %c0_16] : memref<2x10xf32, #tpu.memory_space<vmem>>, vector<2x10xf32>
    tpu.vector_store %arg8[%c0_15, %c0_16], %15 {strides = array<i32>} : memref<2x10xf32, #tpu.memory_space<vmem>>, vector<2x10xf32>,
    return
  }
  func.func @transform_0(%arg0: i32) -> (i32, i32) {
    %c0_i32 = arith.constant 0 : i32
    %c0_i32_0 = arith.constant 0 : i32
    return %arg0, %c0_i32 : i32, i32
  }
  func.func @transform_1(%arg0: i32) -> (i32, i32) {
    %c0_i32 = arith.constant 0 : i32
    %c0_i32_0 = arith.constant 0 : i32
    %c0_i32_1 = arith.constant 0 : i32
    return %c0_i32, %c0_i32_0 : i32, i32
  }
  func.func @transform_2(%arg0: i32) -> (i32, i32) {
    %c0_i32 = arith.constant 0 : i32
    %c0_i32_0 = arith.constant 0 : i32
    %c0_i32_1 = arith.constant 0 : i32
    return %c0_i32, %c0_i32_0 : i32, i32
  }
  func.func @transform_3(%arg0: i32) -> (i32, i32) {
    %c0_i32 = arith.constant 0 : i32
    %c0_i32_0 = arith.constant 0 : i32
    %c0_i32_1 = arith.constant 0 : i32
    return %c0_i32, %c0_i32_0 : i32, i32
  }
  func.func @transform_4(%arg0: i32) -> (i32, i32) {
    %c0_i32 = arith.constant 0 : i32
    %c0_i32_0 = arith.constant 0 : i32
    %c0_i32_1 = arith.constant 0 : i32
    return %c0_i32, %c0_i32_0 : i32, i32
  }
  func.func @transform_5(%arg0: i32) -> (i32, i32) {
    %c0_i32 = arith.constant 0 : i32
    %c0_i32_0 = arith.constant 0 : i32
    %c0_i32_1 = arith.constant 0 : i32
    return %c0_i32, %c0_i32_0 : i32, i32
  }
  func.func @transform_6(%arg0: i32) -> (i32, i32) {
    %c0_i32 = arith.constant 0 : i32
    %c0_i32_0 = arith.constant 0 : i32
    %c0_i32_1 = arith.constant 0 : i32
    return %c0_i32, %c0_i32_0 : i32, i32
  }
  func.func @transform_7(%arg0: i32) -> (i32, i32) {
    %c0_i32 = arith.constant 0 : i32
    %c0_i32_0 = arith.constant 0 : i32
    return %arg0, %c0_i32 : i32, i32
  }
}

</mosaic_0001>

<llo_original>
// kernel: tpu_custom_call.1
$region0: #{tpu_custom_call.1}
  #allocation0 [shape = 'u32[]', space=smem, size = 0x4, offset = 0x4, fixed_abs, tag = 'smem constant byte address 0x4 - core index']
  #allocation1 [shape = 'u32[144,128]{1,0:T(1,128)}', space=vmem, size = 0x12000, scoped, tag = 'internal scratch']
  %s0 = inlined_call_operand.vmem [shape: f32[2,3072], index: 0, kind: input, shape index: {}]
  %s1 = inlined_call_operand.vmem [shape: f32[3072,32], index: 1, kind: input, shape index: {}]
  %s2 = inlined_call_operand.vmem [shape: f32[1,32], index: 2, kind: input, shape index: {}]
  %s3 = inlined_call_operand.vmem [shape: f32[32,24], index: 3, kind: input, shape index: {}]
  %s4 = inlined_call_operand.vmem [shape: f32[1,24], index: 4, kind: input, shape index: {}]
  %s5 = inlined_call_operand.vmem [shape: f32[24,10], index: 5, kind: input, shape index: {}]
  %s6 = inlined_call_operand.vmem [shape: f32[1,10], index: 6, kind: input, shape index: {}]
  %s7 = inlined_call_operand.hbm [shape: f32[2,10], index: 7, kind: output, shape index: {}]
  %s8 = sld [smem:[#allocation0]]
  $region38: #{tpu_custom_call.1} parent=0
    _
  %s10 = ssub.s32 1, %s8
  %s11 = scalar_select 0, %s10, %s8
  $region1: #{tpu_custom_call.1} parent=0
    #allocation2 [shape = 'u8[1024]{0}', space=vmem, size = 0x400, scoped, tag = 'output window, operand 0, single buffered']
    #allocation3 [shape = 's32[1]{0}', space=sflag, size = 0x4, scoped, tag = 'scoped memory for tpu_custom_call.1']
    %12 = vsyncpa [#allocation3], 0
    // Predicated region
    $region2: #{tpu_custom_call.1} parent=1 // pred_check
      _
    $region3: #{tpu_custom_call.1} parent=1 // pred_check_branch
      %14 = sbr.rel (0) target = $region5
    $region4: #{tpu_custom_call.1} parent=1 // pred_region
      _
    $region5: #{tpu_custom_call.1} parent=1 // pred_fallthru
      _
    // Predicated region
    $region6: #{tpu_custom_call.1} parent=1 // pred_check
      _
    $region7: #{tpu_custom_call.1} parent=1 // pred_check_branch
      %16 = sbr.rel (0) target = $region9
    $region8: #{tpu_custom_call.1} parent=1 // pred_region
      _
    $region9: #{tpu_custom_call.1} parent=1 // pred_fallthru
      _
    // Predicated region
    $region10: #{tpu_custom_call.1} parent=1 // pred_check
      _
    $region11: #{tpu_custom_call.1} parent=1 // pred_check_branch
      %18 = sbr.rel (0) target = $region13
    $region12: #{tpu_custom_call.1} parent=1 // pred_region
      _
    $region13: #{tpu_custom_call.1} parent=1 // pred_fallthru
      _
    // Predicated region
    $region14: #{tpu_custom_call.1} parent=1 // pred_check
      _
    $region15: #{tpu_custom_call.1} parent=1 // pred_check_branch
      %20 = sbr.rel (0) target = $region17
    $region16: #{tpu_custom_call.1} parent=1 // pred_region
      _
    $region17: #{tpu_custom_call.1} parent=1 // pred_fallthru
      _
    // Predicated region
    $region18: #{tpu_custom_call.1} parent=1 // pred_check
      _
    $region19: #{tpu_custom_call.1} parent=1 // pred_check_branch
      %22 = sbr.rel (0) target = $region21
    $region20: #{tpu_custom_call.1} parent=1 // pred_region
      _
    $region21: #{tpu_custom_call.1} parent=1 // pred_fallthru
      _
    // Predicated region
    $region22: #{tpu_custom_call.1} parent=1 // pred_check
      _
    $region23: #{tpu_custom_call.1} parent=1 // pred_check_branch
      %24 = sbr.rel (0) target = $region25
    $region24: #{tpu_custom_call.1} parent=1 // pred_region
      _
    $region25: #{tpu_custom_call.1} parent=1 // pred_fallthru
      _
    // Predicated region
    $region26: #{tpu_custom_call.1} parent=1 // pred_check
      _
    $region27: #{tpu_custom_call.1} parent=1 // pred_check_branch
      %26 = sbr.rel (0) target = $region29
    $region28: #{tpu_custom_call.1} parent=1 // pred_region
      _
    $region29: #{tpu_custom_call.1} parent=1 // pred_fallthru
      _
    %v27 = vld [vmem:[%s0] sm:$0xff]
    %v28 = vld [vmem:[%s0 + $0x8] sm:$0xff]
    %v29 = vld [vmem:[%s0 + $0x10] sm:$0xff]
    %v30 = vld [vmem:[%s0 + $0x18] sm:$0xff]
    %v31 = vld [vmem:[%s0 + $0x20] sm:$0xff]
    %v32 = vld [vmem:[%s0 + $0x28] sm:$0xff]
    %v33 = vld [vmem:[%s1] sm:$0xff]
    %v34 = vld [vmem:[%s1 + $0x8] sm:$0xff]
    %v35 = vld [vmem:[%s1 + $0x10] sm:$0xff]
    %v36 = vld [vmem:[%s1 + $0x18] sm:$0xff]
    %v37 = vld [vmem:[%s1 + $0x20] sm:$0xff]
    %v38 = vld [vmem:[%s1 + $0x28] sm:$0xff]
    %v39 = vld [vmem:[%s1 + $0x30] sm:$0xff]
    %v40 = vld [vmem:[%s1 + $0x38] sm:$0xff]
    %v41 = vld [vmem:[%s1 + $0x40] sm:$0xff]
    %v42 = vld [vmem:[%s1 + $0x48] sm:$0xff]
    %v43 = vld [vmem:[%s1 + $0x50] sm:$0xff]
    %v44 = vld [vmem:[%s1 + $0x58] sm:$0xff]
    %v45 = vld [vmem:[%s1 + $0x60] sm:$0xff]
    %v46 = vld [vmem:[%s1 + $0x68] sm:$0xff]
    %v47 = vld [vmem:[%s1 + $0x70] sm:$0xff]
    %v48 = vld [vmem:[%s1 + $0x78] sm:$0xff]
    %v49 = vld [vmem:[%s1 + $0x80] sm:$0xff]
    %v50 = vld [vmem:[%s1 + $0x88] sm:$0xff]
    %v51 = vld [vmem:[%s1 + $0x90] sm:$0xff]
    %v52 = vld [vmem:[%s1 + $0x98] sm:$0xff]
    %v53 = vld [vmem:[%s1 + $0xa0] sm:$0xff]
    %v54 = vld [vmem:[%s1 + $0xa8] sm:$0xff]
    %v55 = vld [vmem:[%s1 + $0xb0] sm:$0xff]
    %v56 = vld [vmem:[%s1 + $0xb8] sm:$0xff]
    %v57 = vld [vmem:[%s1 + $0xc0] sm:$0xff]
    %v58 = vld [vmem:[%s1 + $0xc8] sm:$0xff]
    %v59 = vld [vmem:[%s1 + $0xd0] sm:$0xff]
    %v60 = vld [vmem:[%s1 + $0xd8] sm:$0xff]
    %v61 = vld [vmem:[%s1 + $0xe0] sm:$0xff]
    %v62 = vld [vmem:[%s1 + $0xe8] sm:$0xff]
    %v63 = vld [vmem:[%s1 + $0xf0] sm:$0xff]
    %v64 = vld [vmem:[%s1 + $0xf8] sm:$0xff]
    %v65 = vld [vmem:[%s1 + $0x100] sm:$0xff]
    %v66 = vld [vmem:[%s1 + $0x108] sm:$0xff]
    %v67 = vld [vmem:[%s1 + $0x110] sm:$0xff]
    %v68 = vld [vmem:[%s1 + $0x118] sm:$0xff]
    %v69 = vld [vmem:[%s1 + $0x120] sm:$0xff]
    %v70 = vld [vmem:[%s1 + $0x128] sm:$0xff]
    %v71 = vld [vmem:[%s1 + $0x130] sm:$0xff]
    %v72 = vld [vmem:[%s1 + $0x138] sm:$0xff]
    %v73 = vld [vmem:[%s1 + $0x140] sm:$0xff]
    %v74 = vld [vmem:[%s1 + $0x148] sm:$0xff]
    %v75 = vld [vmem:[%s1 + $0x150] sm:$0xff]
    %v76 = vld [vmem:[%s1 + $0x158] sm:$0xff]
    %v77 = vld [vmem:[%s1 + $0x160] sm:$0xff]
    %v78 = vld [vmem:[%s1 + $0x168] sm:$0xff]
    %v79 = vld [vmem:[%s1 + $0x170] sm:$0xff]
    %v80 = vld [vmem:[%s1 + $0x178] sm:$0xff]
    %v81 = vld [vmem:[%s1 + $0x180] sm:$0xff]
    %v82 = vld [vmem:[%s1 + $0x188] sm:$0xff]
    %v83 = vld [vmem:[%s1 + $0x190] sm:$0xff]
    %v84 = vld [vmem:[%s1 + $0x198] sm:$0xff]
    %v85 = vld [vmem:[%s1 + $0x1a0] sm:$0xff]
    %v86 = vld [vmem:[%s1 + $0x1a8] sm:$0xff]
    %v87 = vld [vmem:[%s1 + $0x1b0] sm:$0xff]
    %v88 = vld [vmem:[%s1 + $0x1b8] sm:$0xff]
    %v89 = vld [vmem:[%s1 + $0x1c0] sm:$0xff]
    %v90 = vld [vmem:[%s1 + $0x1c8] sm:$0xff]
    %v91 = vld [vmem:[%s1 + $0x1d0] sm:$0xff]
    %v92 = vld [vmem:[%s1 + $0x1d8] sm:$0xff]
    %v93 = vld [vmem:[%s1 + $0x1e0] sm:$0xff]
    %v94 = vld [vmem:[%s1 + $0x1e8] sm:$0xff]
    %v95 = vld [vmem:[%s1 + $0x1f0] sm:$0xff]
    %v96 = vld [vmem:[%s1 + $0x1f8] sm:$0xff]
    %v97 = vld [vmem:[%s1 + $0x200] sm:$0xff]
    %v98 = vld [vmem:[%s1 + $0x208] sm:$0xff]
    %v99 = vld [vmem:[%s1 + $0x210] sm:$0xff]
    %v100 = vld [vmem:[%s1 + $0x218] sm:$0xff]
    %v101 = vld [vmem:[%s1 + $0x220] sm:$0xff]
    %v102 = vld [vmem:[%s1 + $0x228] sm:$0xff]
    %v103 = vld [vmem:[%s1 + $0x230] sm:$0xff]
    %v104 = vld [vmem:[%s1 + $0x238] sm:$0xff]
    %v105 = vld [vmem:[%s1 + $0x240] sm:$0xff]
    %v106 = vld [vmem:[%s1 + $0x248] sm:$0xff]
    %v107 = vld [vmem:[%s1 + $0x250] sm:$0xff]
    %v108 = vld [vmem:[%s1 + $0x258] sm:$0xff]
    %v109 = vld [vmem:[%s1 + $0x260] sm:$0xff]
    %v110 = vld [vmem:[%s1 + $0x268] sm:$0xff]
    %v111 = vld [vmem:[%s1 + $0x270] sm:$0xff]
    %v112 = vld [vmem:[%s1 + $0x278] sm:$0xff]
    %v113 = vld [vmem:[%s1 + $0x280] sm:$0xff]
    %v114 = vld [vmem:[%s1 + $0x288] sm:$0xff]
    %v115 = vld [vmem:[%s1 + $0x290] sm:$0xff]
    %v116 = vld [vmem:[%s1 + $0x298] sm:$0xff]
    %v117 = vld [vmem:[%s1 + $0x2a0] sm:$0xff]
    %v118 = vld [vmem:[%s1 + $0x2a8] sm:$0xff]
    %v119 = vld [vmem:[%s1 + $0x2b0] sm:$0xff]
    %v120 = vld [vmem:[%s1 + $0x2b8] sm:$0xff]
    %v121 = vld [vmem:[%s1 + $0x2c0] sm:$0xff]
    %v122 = vld [vmem:[%s1 + $0x2c8] sm:$0xff]
    %v123 = vld [vmem:[%s1 + $0x2d0] sm:$0xff]
    %v124 = vld [vmem:[%s1 + $0x2d8] sm:$0xff]
    %v125 = vld [vmem:[%s1 + $0x2e0] sm:$0xff]
    %v126 = vld [vmem:[%s1 + $0x2e8] sm:$0xff]
    %v127 = vld [vmem:[%s1 + $0x2f0] sm:$0xff]
    %v128 = vld [vmem:[%s1 + $0x2f8] sm:$0xff]
    %v129 = vld [vmem:[%s1 + $0x300] sm:$0xff]
    %v130 = vld [vmem:[%s1 + $0x308] sm:$0xff]
    %v131 = vld [vmem:[%s1 + $0x310] sm:$0xff]
    %v132 = vld [vmem:[%s1 + $0x318] sm:$0xff]
    %v133 = vld [vmem:[%s1 + $0x320] sm:$0xff]
    %v134 = vld [vmem:[%s1 + $0x328] sm:$0xff]
    %v135 = vld [vmem:[%s1 + $0x330] sm:$0xff]
    %v136 = vld [vmem:[%s1 + $0x338] sm:$0xff]
    %v137 = vld [vmem:[%s1 + $0x340] sm:$0xff]
    %v138 = vld [vmem:[%s1 + $0x348] sm:$0xff]
    %v139 = vld [vmem:[%s1 + $0x350] sm:$0xff]
    %v140 = vld [vmem:[%s1 + $0x358] sm:$0xff]
    %v141 = vld [vmem:[%s1 + $0x360] sm:$0xff]
    %v142 = vld [vmem:[%s1 + $0x368] sm:$0xff]
    %v143 = vld [vmem:[%s1 + $0x370] sm:$0xff]
    %v144 = vld [vmem:[%s1 + $0x378] sm:$0xff]
    %v145 = vld [vmem:[%s1 + $0x380] sm:$0xff]
    %v146 = vld [vmem:[%s1 + $0x388] sm:$0xff]
    %v147 = vld [vmem:[%s1 + $0x390] sm:$0xff]
    %v148 = vld [vmem:[%s1 + $0x398] sm:$0xff]
    %v149 = vld [vmem:[%s1 + $0x3a0] sm:$0xff]
    %v150 = vld [vmem:[%s1 + $0x3a8] sm:$0xff]
    %v151 = vld [vmem:[%s1 + $0x3b0] sm:$0xff]
    %v152 = vld [vmem:[%s1 + $0x3b8] sm:$0xff]
    %v153 = vld [vmem:[%s1 + $0x3c0] sm:$0xff]
    %v154 = vld [vmem:[%s1 + $0x3c8] sm:$0xff]
    %v155 = vld [vmem:[%s1 + $0x3d0] sm:$0xff]
    %v156 = vld [vmem:[%s1 + $0x3d8] sm:$0xff]
    %v157 = vld [vmem:[%s1 + $0x3e0] sm:$0xff]
    %v158 = vld [vmem:[%s1 + $0x3e8] sm:$0xff]
    %v159 = vld [vmem:[%s1 + $0x3f0] sm:$0xff]
    %v160 = vld [vmem:[%s1 + $0x3f8] sm:$0xff]
    %v161 = vld [vmem:[%s1 + $0x400] sm:$0xff]
    %v162 = vld [vmem:[%s1 + $0x408] sm:$0xff]
    %v163 = vld [vmem:[%s1 + $0x410] sm:$0xff]
    %v164 = vld [vmem:[%s1 + $0x418] sm:$0xff]
    %v165 = vld [vmem:[%s1 + $0x420] sm:$0xff]
    %v166 = vld [vmem:[%s1 + $0x428] sm:$0xff]
    %v167 = vld [vmem:[%s1 + $0x430] sm:$0xff]
    %v168 = vld [vmem:[%s1 + $0x438] sm:$0xff]
    %v169 = vld [vmem:[%s1 + $0x440] sm:$0xff]
    %v170 = vld [vmem:[%s1 + $0x448] sm:$0xff]
    %v171 = vld [vmem:[%s1 + $0x450] sm:$0xff]
    %v172 = vld [vmem:[%s1 + $0x458] sm:$0xff]
    %v173 = vld [vmem:[%s1 + $0x460] sm:$0xff]
    %v174 = vld [vmem:[%s1 + $0x468] sm:$0xff]
    %v175 = vld [vmem:[%s1 + $0x470] sm:$0xff]
    %v176 = vld [vmem:[%s1 + $0x478] sm:$0xff]
    %v177 = vld [vmem:[%s1 + $0x480] sm:$0xff]
    %v178 = vld [vmem:[%s1 + $0x488] sm:$0xff]
    %v179 = vld [vmem:[%s1 + $0x490] sm:$0xff]
    %v180 = vld [vmem:[%s1 + $0x498] sm:$0xff]
    %v181 = vld [vmem:[%s1 + $0x4a0] sm:$0xff]
    %v182 = vld [vmem:[%s1 + $0x4a8] sm:$0xff]
    %v183 = vld [vmem:[%s1 + $0x4b0] sm:$0xff]
    %v184 = vld [vmem:[%s1 + $0x4b8] sm:$0xff]
    %v185 = vld [vmem:[%s1 + $0x4c0] sm:$0xff]
    %v186 = vld [vmem:[%s1 + $0x4c8] sm:$0xff]
    %v187 = vld [vmem:[%s1 + $0x4d0] sm:$0xff]
    %v188 = vld [vmem:[%s1 + $0x4d8] sm:$0xff]
    %v189 = vld [vmem:[%s1 + $0x4e0] sm:$0xff]
    %v190 = vld [vmem:[%s1 + $0x4e8] sm:$0xff]
    %v191 = vld [vmem:[%s1 + $0x4f0] sm:$0xff]
    %v192 = vld [vmem:[%s1 + $0x4f8] sm:$0xff]
    %v193 = vld [vmem:[%s1 + $0x500] sm:$0xff]
    %v194 = vld [vmem:[%s1 + $0x508] sm:$0xff]
    %v195 = vld [vmem:[%s1 + $0x510] sm:$0xff]
    %v196 = vld [vmem:[%s1 + $0x518] sm:$0xff]
    %v197 = vld [vmem:[%s1 + $0x520] sm:$0xff]
    %v198 = vld [vmem:[%s1 + $0x528] sm:$0xff]
    %v199 = vld [vmem:[%s1 + $0x530] sm:$0xff]
    %v200 = vld [vmem:[%s1 + $0x538] sm:$0xff]
    %v201 = vld [vmem:[%s1 + $0x540] sm:$0xff]
    %v202 = vld [vmem:[%s1 + $0x548] sm:$0xff]
    %v203 = vld [vmem:[%s1 + $0x550] sm:$0xff]
    %v204 = vld [vmem:[%s1 + $0x558] sm:$0xff]
    %v205 = vld [vmem:[%s1 + $0x560] sm:$0xff]
    %v206 = vld [vmem:[%s1 + $0x568] sm:$0xff]
    %v207 = vld [vmem:[%s1 + $0x570] sm:$0xff]
    %v208 = vld [vmem:[%s1 + $0x578] sm:$0xff]
    %v209 = vld [vmem:[%s1 + $0x580] sm:$0xff]
    %v210 = vld [vmem:[%s1 + $0x588] sm:$0xff]
    %v211 = vld [vmem:[%s1 + $0x590] sm:$0xff]
    %v212 = vld [vmem:[%s1 + $0x598] sm:$0xff]
    %v213 = vld [vmem:[%s1 + $0x5a0] sm:$0xff]
    %v214 = vld [vmem:[%s1 + $0x5a8] sm:$0xff]
    %v215 = vld [vmem:[%s1 + $0x5b0] sm:$0xff]
    %v216 = vld [vmem:[%s1 + $0x5b8] sm:$0xff]
    %v217 = vld [vmem:[%s1 + $0x5c0] sm:$0xff]
    %v218 = vld [vmem:[%s1 + $0x5c8] sm:$0xff]
    %v219 = vld [vmem:[%s1 + $0x5d0] sm:$0xff]
    %v220 = vld [vmem:[%s1 + $0x5d8] sm:$0xff]
    %v221 = vld [vmem:[%s1 + $0x5e0] sm:$0xff]
    %v222 = vld [vmem:[%s1 + $0x5e8] sm:$0xff]
    %v223 = vld [vmem:[%s1 + $0x5f0] sm:$0xff]
    %v224 = vld [vmem:[%s1 + $0x5f8] sm:$0xff]
    %v225 = vld [vmem:[%s1 + $0x600] sm:$0xff]
    %v226 = vld [vmem:[%s1 + $0x608] sm:$0xff]
    %v227 = vld [vmem:[%s1 + $0x610] sm:$0xff]
    %v228 = vld [vmem:[%s1 + $0x618] sm:$0xff]
    %v229 = vld [vmem:[%s1 + $0x620] sm:$0xff]
    %v230 = vld [vmem:[%s1 + $0x628] sm:$0xff]
    %v231 = vld [vmem:[%s1 + $0x630] sm:$0xff]
    %v232 = vld [vmem:[%s1 + $0x638] sm:$0xff]
    %v233 = vld [vmem:[%s1 + $0x640] sm:$0xff]
    %v234 = vld [vmem:[%s1 + $0x648] sm:$0xff]
    %v235 = vld [vmem:[%s1 + $0x650] sm:$0xff]
    %v236 = vld [vmem:[%s1 + $0x658] sm:$0xff]
    %v237 = vld [vmem:[%s1 + $0x660] sm:$0xff]
    %v238 = vld [vmem:[%s1 + $0x668] sm:$0xff]
    %v239 = vld [vmem:[%s1 + $0x670] sm:$0xff]
    %v240 = vld [vmem:[%s1 + $0x678] sm:$0xff]
    %v241 = vld [vmem:[%s1 + $0x680] sm:$0xff]
    %v242 = vld [vmem:[%s1 + $0x688] sm:$0xff]
    %v243 = vld [vmem:[%s1 + $0x690] sm:$0xff]
    %v244 = vld [vmem:[%s1 + $0x698] sm:$0xff]
    %v245 = vld [vmem:[%s1 + $0x6a0] sm:$0xff]
    %v246 = vld [vmem:[%s1 + $0x6a8] sm:$0xff]
    %v247 = vld [vmem:[%s1 + $0x6b0] sm:$0xff]
    %v248 = vld [vmem:[%s1 + $0x6b8] sm:$0xff]
    %v249 = vld [vmem:[%s1 + $0x6c0] sm:$0xff]
    %v250 = vld [vmem:[%s1 + $0x6c8] sm:$0xff]
    %v251 = vld [vmem:[%s1 + $0x6d0] sm:$0xff]
    %v252 = vld [vmem:[%s1 + $0x6d8] sm:$0xff]
    %v253 = vld [vmem:[%s1 + $0x6e0] sm:$0xff]
    %v254 = vld [vmem:[%s1 + $0x6e8] sm:$0xff]
    %v255 = vld [vmem:[%s1 + $0x6f0] sm:$0xff]
    %v256 = vld [vmem:[%s1 + $0x6f8] sm:$0xff]
    %v257 = vld [vmem:[%s1 + $0x700] sm:$0xff]
    %v258 = vld [vmem:[%s1 + $0x708] sm:$0xff]
    %v259 = vld [vmem:[%s1 + $0x710] sm:$0xff]
    %v260 = vld [vmem:[%s1 + $0x718] sm:$0xff]
    %v261 = vld [vmem:[%s1 + $0x720] sm:$0xff]
    %v262 = vld [vmem:[%s1 + $0x728] sm:$0xff]
    %v263 = vld [vmem:[%s1 + $0x730] sm:$0xff]
    %v264 = vld [vmem:[%s1 + $0x738] sm:$0xff]
    %v265 = vld [vmem:[%s1 + $0x740] sm:$0xff]
    %v266 = vld [vmem:[%s1 + $0x748] sm:$0xff]
    %v267 = vld [vmem:[%s1 + $0x750] sm:$0xff]
    %v268 = vld [vmem:[%s1 + $0x758] sm:$0xff]
    %v269 = vld [vmem:[%s1 + $0x760] sm:$0xff]
    %v270 = vld [vmem:[%s1 + $0x768] sm:$0xff]
    %v271 = vld [vmem:[%s1 + $0x770] sm:$0xff]
    %v272 = vld [vmem:[%s1 + $0x778] sm:$0xff]
    %v273 = vld [vmem:[%s1 + $0x780] sm:$0xff]
    %v274 = vld [vmem:[%s1 + $0x788] sm:$0xff]
    %v275 = vld [vmem:[%s1 + $0x790] sm:$0xff]
    %v276 = vld [vmem:[%s1 + $0x798] sm:$0xff]
    %v277 = vld [vmem:[%s1 + $0x7a0] sm:$0xff]
    %v278 = vld [vmem:[%s1 + $0x7a8] sm:$0xff]
    %v279 = vld [vmem:[%s1 + $0x7b0] sm:$0xff]
    %v280 = vld [vmem:[%s1 + $0x7b8] sm:$0xff]
    %v281 = vld [vmem:[%s1 + $0x7c0] sm:$0xff]
    %v282 = vld [vmem:[%s1 + $0x7c8] sm:$0xff]
    %v283 = vld [vmem:[%s1 + $0x7d0] sm:$0xff]
    %v284 = vld [vmem:[%s1 + $0x7d8] sm:$0xff]
    %v285 = vld [vmem:[%s1 + $0x7e0] sm:$0xff]
    %v286 = vld [vmem:[%s1 + $0x7e8] sm:$0xff]
    %v287 = vld [vmem:[%s1 + $0x7f0] sm:$0xff]
    %v288 = vld [vmem:[%s1 + $0x7f8] sm:$0xff]
    %v289 = vld [vmem:[%s1 + $0x800] sm:$0xff]
    %v290 = vld [vmem:[%s1 + $0x808] sm:$0xff]
    %v291 = vld [vmem:[%s1 + $0x810] sm:$0xff]
    %v292 = vld [vmem:[%s1 + $0x818] sm:$0xff]
    %v293 = vld [vmem:[%s1 + $0x820] sm:$0xff]
    %v294 = vld [vmem:[%s1 + $0x828] sm:$0xff]
    %v295 = vld [vmem:[%s1 + $0x830] sm:$0xff]
    %v296 = vld [vmem:[%s1 + $0x838] sm:$0xff]
    %v297 = vld [vmem:[%s1 + $0x840] sm:$0xff]
    %v298 = vld [vmem:[%s1 + $0x848] sm:$0xff]
    %v299 = vld [vmem:[%s1 + $0x850] sm:$0xff]
    %v300 = vld [vmem:[%s1 + $0x858] sm:$0xff]
    %v301 = vld [vmem:[%s1 + $0x860] sm:$0xff]
    %v302 = vld [vmem:[%s1 + $0x868] sm:$0xff]
    %v303 = vld [vmem:[%s1 + $0x870] sm:$0xff]
    %v304 = vld [vmem:[%s1 + $0x878] sm:$0xff]
    %v305 = vld [vmem:[%s1 + $0x880] sm:$0xff]
    %v306 = vld [vmem:[%s1 + $0x888] sm:$0xff]
    %v307 = vld [vmem:[%s1 + $0x890] sm:$0xff]
    %v308 = vld [vmem:[%s1 + $0x898] sm:$0xff]
    %v309 = vld [vmem:[%s1 + $0x8a0] sm:$0xff]
    %v310 = vld [vmem:[%s1 + $0x8a8] sm:$0xff]
    %v311 = vld [vmem:[%s1 + $0x8b0] sm:$0xff]
    %v312 = vld [vmem:[%s1 + $0x8b8] sm:$0xff]
    %v313 = vld [vmem:[%s1 + $0x8c0] sm:$0xff]
    %v314 = vld [vmem:[%s1 + $0x8c8] sm:$0xff]
    %v315 = vld [vmem:[%s1 + $0x8d0] sm:$0xff]
    %v316 = vld [vmem:[%s1 + $0x8d8] sm:$0xff]
    %v317 = vld [vmem:[%s1 + $0x8e0] sm:$0xff]
    %v318 = vld [vmem:[%s1 + $0x8e8] sm:$0xff]
    %v319 = vld [vmem:[%s1 + $0x8f0] sm:$0xff]
    %v320 = vld [vmem:[%s1 + $0x8f8] sm:$0xff]
    %v321 = vld [vmem:[%s1 + $0x900] sm:$0xff]
    %v322 = vld [vmem:[%s1 + $0x908] sm:$0xff]
    %v323 = vld [vmem:[%s1 + $0x910] sm:$0xff]
    %v324 = vld [vmem:[%s1 + $0x918] sm:$0xff]
    %v325 = vld [vmem:[%s1 + $0x920] sm:$0xff]
    %v326 = vld [vmem:[%s1 + $0x928] sm:$0xff]
    %v327 = vld [vmem:[%s1 + $0x930] sm:$0xff]
    %v328 = vld [vmem:[%s1 + $0x938] sm:$0xff]
    %v329 = vld [vmem:[%s1 + $0x940] sm:$0xff]
    %v330 = vld [vmem:[%s1 + $0x948] sm:$0xff]
    %v331 = vld [vmem:[%s1 + $0x950] sm:$0xff]
    %v332 = vld [vmem:[%s1 + $0x958] sm:$0xff]
    %v333 = vld [vmem:[%s1 + $0x960] sm:$0xff]
    %v334 = vld [vmem:[%s1 + $0x968] sm:$0xff]
    %v335 = vld [vmem:[%s1 + $0x970] sm:$0xff]
    %v336 = vld [vmem:[%s1 + $0x978] sm:$0xff]
    %v337 = vld [vmem:[%s1 + $0x980] sm:$0xff]
    %v338 = vld [vmem:[%s1 + $0x988] sm:$0xff]
    %v339 = vld [vmem:[%s1 + $0x990] sm:$0xff]
    %v340 = vld [vmem:[%s1 + $0x998] sm:$0xff]
    %v341 = vld [vmem:[%s1 + $0x9a0] sm:$0xff]
    %v342 = vld [vmem:[%s1 + $0x9a8] sm:$0xff]
    %v343 = vld [vmem:[%s1 + $0x9b0] sm:$0xff]
    %v344 = vld [vmem:[%s1 + $0x9b8] sm:$0xff]
    %v345 = vld [vmem:[%s1 + $0x9c0] sm:$0xff]
    %v346 = vld [vmem:[%s1 + $0x9c8] sm:$0xff]
    %v347 = vld [vmem:[%s1 + $0x9d0] sm:$0xff]
    %v348 = vld [vmem:[%s1 + $0x9d8] sm:$0xff]
    %v349 = vld [vmem:[%s1 + $0x9e0] sm:$0xff]
    %v350 = vld [vmem:[%s1 + $0x9e8] sm:$0xff]
    %v351 = vld [vmem:[%s1 + $0x9f0] sm:$0xff]
    %v352 = vld [vmem:[%s1 + $0x9f8] sm:$0xff]
    %v353 = vld [vmem:[%s1 + $0xa00] sm:$0xff]
    %v354 = vld [vmem:[%s1 + $0xa08] sm:$0xff]
    %v355 = vld [vmem:[%s1 + $0xa10] sm:$0xff]
    %v356 = vld [vmem:[%s1 + $0xa18] sm:$0xff]
    %v357 = vld [vmem:[%s1 + $0xa20] sm:$0xff]
    %v358 = vld [vmem:[%s1 + $0xa28] sm:$0xff]
    %v359 = vld [vmem:[%s1 + $0xa30] sm:$0xff]
    %v360 = vld [vmem:[%s1 + $0xa38] sm:$0xff]
    %v361 = vld [vmem:[%s1 + $0xa40] sm:$0xff]
    %v362 = vld [vmem:[%s1 + $0xa48] sm:$0xff]
    %v363 = vld [vmem:[%s1 + $0xa50] sm:$0xff]
    %v364 = vld [vmem:[%s1 + $0xa58] sm:$0xff]
    %v365 = vld [vmem:[%s1 + $0xa60] sm:$0xff]
    %v366 = vld [vmem:[%s1 + $0xa68] sm:$0xff]
    %v367 = vld [vmem:[%s1 + $0xa70] sm:$0xff]
    %v368 = vld [vmem:[%s1 + $0xa78] sm:$0xff]
    %v369 = vld [vmem:[%s1 + $0xa80] sm:$0xff]
    %v370 = vld [vmem:[%s1 + $0xa88] sm:$0xff]
    %v371 = vld [vmem:[%s1 + $0xa90] sm:$0xff]
    %v372 = vld [vmem:[%s1 + $0xa98] sm:$0xff]
    %v373 = vld [vmem:[%s1 + $0xaa0] sm:$0xff]
    %v374 = vld [vmem:[%s1 + $0xaa8] sm:$0xff]
    %v375 = vld [vmem:[%s1 + $0xab0] sm:$0xff]
    %v376 = vld [vmem:[%s1 + $0xab8] sm:$0xff]
    %v377 = vld [vmem:[%s1 + $0xac0] sm:$0xff]
    %v378 = vld [vmem:[%s1 + $0xac8] sm:$0xff]
    %v379 = vld [vmem:[%s1 + $0xad0] sm:$0xff]
    %v380 = vld [vmem:[%s1 + $0xad8] sm:$0xff]
    %v381 = vld [vmem:[%s1 + $0xae0] sm:$0xff]
    %v382 = vld [vmem:[%s1 + $0xae8] sm:$0xff]
    %v383 = vld [vmem:[%s1 + $0xaf0] sm:$0xff]
    %v384 = vld [vmem:[%s1 + $0xaf8] sm:$0xff]
    %v385 = vld [vmem:[%s1 + $0xb00] sm:$0xff]
    %v386 = vld [vmem:[%s1 + $0xb08] sm:$0xff]
    %v387 = vld [vmem:[%s1 + $0xb10] sm:$0xff]
    %v388 = vld [vmem:[%s1 + $0xb18] sm:$0xff]
    %v389 = vld [vmem:[%s1 + $0xb20] sm:$0xff]
    %v390 = vld [vmem:[%s1 + $0xb28] sm:$0xff]
    %v391 = vld [vmem:[%s1 + $0xb30] sm:$0xff]
    %v392 = vld [vmem:[%s1 + $0xb38] sm:$0xff]
    %v393 = vld [vmem:[%s1 + $0xb40] sm:$0xff]
    %v394 = vld [vmem:[%s1 + $0xb48] sm:$0xff]
    %v395 = vld [vmem:[%s1 + $0xb50] sm:$0xff]
    %v396 = vld [vmem:[%s1 + $0xb58] sm:$0xff]
    %v397 = vld [vmem:[%s1 + $0xb60] sm:$0xff]
    %v398 = vld [vmem:[%s1 + $0xb68] sm:$0xff]
    %v399 = vld [vmem:[%s1 + $0xb70] sm:$0xff]
    %v400 = vld [vmem:[%s1 + $0xb78] sm:$0xff]
    %v401 = vld [vmem:[%s1 + $0xb80] sm:$0xff]
    %v402 = vld [vmem:[%s1 + $0xb88] sm:$0xff]
    %v403 = vld [vmem:[%s1 + $0xb90] sm:$0xff]
    %v404 = vld [vmem:[%s1 + $0xb98] sm:$0xff]
    %v405 = vld [vmem:[%s1 + $0xba0] sm:$0xff]
    %v406 = vld [vmem:[%s1 + $0xba8] sm:$0xff]
    %v407 = vld [vmem:[%s1 + $0xbb0] sm:$0xff]
    %v408 = vld [vmem:[%s1 + $0xbb8] sm:$0xff]
    %v409 = vld [vmem:[%s1 + $0xbc0] sm:$0xff]
    %v410 = vld [vmem:[%s1 + $0xbc8] sm:$0xff]
    %v411 = vld [vmem:[%s1 + $0xbd0] sm:$0xff]
    %v412 = vld [vmem:[%s1 + $0xbd8] sm:$0xff]
    %v413 = vld [vmem:[%s1 + $0xbe0] sm:$0xff]
    %v414 = vld [vmem:[%s1 + $0xbe8] sm:$0xff]
    %v415 = vld [vmem:[%s1 + $0xbf0] sm:$0xff]
    %v416 = vld [vmem:[%s1 + $0xbf8] sm:$0xff]
    %v417 = vld [vmem:[%s2] sm:$0x1]
    %v419 = vlaneseq
    %v420 = vshrl.u32 %v419, 7
    %v421 = vsub.s32 0, %v420
    %v422 = vrot.slane %v417, %v421
    %v430 = vcombine.high %v27, %v27
    %v432 = vunpack.c.l.s4 1983009808
    %v433 = vunpack.c.0.s8 %v432
    %v434 = vlaneseq
    %v435 = vshrl.u32 %v434, 7
    %v436 = vsub.s32 %v433, %v435
    %v437 = vrot.slane %v27, %v436
    %v439 = vunpack.c.l.s4 1983009808
    %v440 = vunpack.c.0.s8 %v439
    %v441 = vlaneseq
    %v442 = vshrl.u32 %v441, 7
    %v443 = vsub.s32 %v440, %v442
    %v444 = vrot.slane %v430, %v443
    %v445 = vcombine.high %v437, %v437
    %v446 = vcombine.high %v444, %v444
    %v447 = vcombine.high %v28, %v28
    %v449 = vunpack.c.l.s4 1983009808
    %v450 = vunpack.c.0.s8 %v449
    %v451 = vlaneseq
    %v452 = vshrl.u32 %v451, 7
    %v453 = vsub.s32 %v450, %v452
    %v454 = vrot.slane %v28, %v453
    %v456 = vunpack.c.l.s4 1983009808
    %v457 = vunpack.c.0.s8 %v456
    %v458 = vlaneseq
    %v459 = vshrl.u32 %v458, 7
    %v460 = vsub.s32 %v457, %v459
    %v461 = vrot.slane %v447, %v460
    %v462 = vcombine.high %v454, %v454
    %v463 = vcombine.high %v461, %v461
    %v464 = vcombine.high %v29, %v29
    %v466 = vunpack.c.l.s4 1983009808
    %v467 = vunpack.c.0.s8 %v466
    %v468 = vlaneseq
    %v469 = vshrl.u32 %v468, 7
    %v470 = vsub.s32 %v467, %v469
    %v471 = vrot.slane %v29, %v470
    %v473 = vunpack.c.l.s4 1983009808
    %v474 = vunpack.c.0.s8 %v473
    %v475 = vlaneseq
    %v476 = vshrl.u32 %v475, 7
    %v477 = vsub.s32 %v474, %v476
    %v478 = vrot.slane %v464, %v477
    %v479 = vcombine.high %v471, %v471
    %v480 = vcombine.high %v478, %v478
    %v481 = vcombine.high %v30, %v30
    %v483 = vunpack.c.l.s4 1983009808
    %v484 = vunpack.c.0.s8 %v483
    %v485 = vlaneseq
    %v486 = vshrl.u32 %v485, 7
    %v487 = vsub.s32 %v484, %v486
    %v488 = vrot.slane %v30, %v487
    %v490 = vunpack.c.l.s4 1983009808
    %v491 = vunpack.c.0.s8 %v490
    %v492 = vlaneseq
    %v493 = vshrl.u32 %v492, 7
    %v494 = vsub.s32 %v491, %v493
    %v495 = vrot.slane %v481, %v494
    %v496 = vcombine.high %v488, %v488
    %v497 = vcombine.high %v495, %v495
    %v498 = vcombine.high %v31, %v31
    %v500 = vunpack.c.l.s4 1983009808
    %v501 = vunpack.c.0.s8 %v500
    %v502 = vlaneseq
    %v503 = vshrl.u32 %v502, 7
    %v504 = vsub.s32 %v501, %v503
    %v505 = vrot.slane %v31, %v504
    %v507 = vunpack.c.l.s4 1983009808
    %v508 = vunpack.c.0.s8 %v507
    %v509 = vlaneseq
    %v510 = vshrl.u32 %v509, 7
    %v511 = vsub.s32 %v508, %v510
    %v512 = vrot.slane %v498, %v511
    %v513 = vcombine.high %v505, %v505
    %v514 = vcombine.high %v512, %v512
    %v515 = vcombine.high %v32, %v32
    %v517 = vunpack.c.l.s4 1983009808
    %v518 = vunpack.c.0.s8 %v517
    %v519 = vlaneseq
    %v520 = vshrl.u32 %v519, 7
    %v521 = vsub.s32 %v518, %v520
    %v522 = vrot.slane %v32, %v521
    %v524 = vunpack.c.l.s4 1983009808
    %v525 = vunpack.c.0.s8 %v524
    %v526 = vlaneseq
    %v527 = vshrl.u32 %v526, 7
    %v528 = vsub.s32 %v525, %v527
    %v529 = vrot.slane %v515, %v528
    %v530 = vcombine.high %v522, %v522
    %v531 = vcombine.high %v529, %v529
    %556 = vmatprep.subr.mxu0 0.0
    %557 = vmatpush1.msra.mxu0 %v33
    %558 = vmatprep.subr.mxu0 0.0
    %559 = vmatpush1.msra.mxu0 %v34
    %560 = vmatprep.subr.mxu0 0.0
    %561 = vmatpush1.msra.mxu0 %v35
    %562 = vmatprep.subr.mxu0 0.0
    %563 = vmatpush1.msra.mxu0 %v36
    %564 = vmatprep.subr.mxu0 0.0
    %565 = vmatpush1.msra.mxu0 %v37
    %566 = vmatprep.subr.mxu0 0.0
    %567 = vmatpush1.msra.mxu0 %v38
    %568 = vmatprep.subr.mxu0 0.0
    %569 = vmatpush1.msra.mxu0 %v39
    %570 = vmatprep.subr.mxu0 0.0
    %571 = vmatpush1.msra.mxu0 %v40
    %572 = vmatprep.subr.mxu0 0.0
    %573 = vmatpush1.msra.mxu0 %v41
    %574 = vmatprep.subr.mxu0 0.0
    %575 = vmatpush1.msra.mxu0 %v42
    %576 = vmatprep.subr.mxu0 0.0
    %577 = vmatpush1.msra.mxu0 %v43
    %578 = vmatprep.subr.mxu0 0.0
    %579 = vmatpush1.msra.mxu0 %v44
    %580 = vmatprep.subr.mxu0 0.0
    %581 = vmatpush1.msra.mxu0 %v45
    %582 = vmatprep.subr.mxu0 0.0
    %583 = vmatpush1.msra.mxu0 %v46
    %584 = vmatprep.subr.mxu0 0.0
    %585 = vmatpush1.msra.mxu0 %v47
    %586 = vmatprep.subr.mxu0 0.0
    %587 = vmatpush1.msra.mxu0 %v48
    %588 = vmatprep.subr.mxu0 0.0
    %589 = vmatpush1.msra.mxu0 %v49
    %590 = vmatprep.subr.mxu0 0.0
    %591 = vmatpush1.msra.mxu0 %v50
    %592 = vmatprep.subr.mxu0 0.0
    %593 = vmatpush1.msra.mxu0 %v51
    %594 = vmatprep.subr.mxu0 0.0
    %595 = vmatpush1.msra.mxu0 %v52
    %596 = vmatprep.subr.mxu0 0.0
    %597 = vmatpush1.msra.mxu0 %v53
    %598 = vmatprep.subr.mxu0 0.0
    %599 = vmatpush1.msra.mxu0 %v54
    %600 = vmatprep.subr.mxu0 0.0
    %601 = vmatpush1.msra.mxu0 %v55
    %602 = vmatprep.subr.mxu0 0.0
    %603 = vmatpush1.msra.mxu0 %v56
    %604 = vmatprep.subr.mxu0 0.0
    %605 = vmatpush1.msra.mxu0 %v57
    %606 = vmatprep.subr.mxu0 0.0
    %607 = vmatpush1.msra.mxu0 %v58
    %608 = vmatprep.subr.mxu0 0.0
    %609 = vmatpush1.msra.mxu0 %v59
    %610 = vmatprep.subr.mxu0 0.0
    %611 = vmatpush1.msra.mxu0 %v60
    %612 = vmatprep.subr.mxu0 0.0
    %613 = vmatpush1.msra.mxu0 %v61
    %614 = vmatprep.subr.mxu0 0.0
    %615 = vmatpush1.msra.mxu0 %v62
    %616 = vmatprep.subr.mxu0 0.0
    %617 = vmatpush1.msra.mxu0 %v63
    %618 = vmatprep.subr.mxu0 0.0
    %619 = vmatpush1.msra.mxu0 %v64
    %620 = vmatprep.mubr.f32.mxu0 %v445
    %621 = vmatmul.mubr.f32.gmra.mrb[0].mxu0 %v437
    %v622 = vpop.f32.mrb[0].mxu0
    %v623 = vadd.f32 %v422, %v622
    %v624 = vpop.f32.mrb[0].mxu0
    %625 = vdwg.mxu0
    %626 = vmatprep.subr.mxu0 0.0
    %627 = vmatpush1.msra.mxu0 %v65
    %628 = vmatprep.subr.mxu0 0.0
    %629 = vmatpush1.msra.mxu0 %v66
    %630 = vmatprep.subr.mxu0 0.0
    %631 = vmatpush1.msra.mxu0 %v67
    %632 = vmatprep.subr.mxu0 0.0
    %633 = vmatpush1.msra.mxu0 %v68
    %634 = vmatprep.subr.mxu0 0.0
    %635 = vmatpush1.msra.mxu0 %v69
    %636 = vmatprep.subr.mxu0 0.0
    %637 = vmatpush1.msra.mxu0 %v70
    %638 = vmatprep.subr.mxu0 0.0
    %639 = vmatpush1.msra.mxu0 %v71
    %640 = vmatprep.subr.mxu0 0.0
    %641 = vmatpush1.msra.mxu0 %v72
    %642 = vmatprep.subr.mxu0 0.0
    %643 = vmatpush1.msra.mxu0 %v73
    %644 = vmatprep.subr.mxu0 0.0
    %645 = vmatpush1.msra.mxu0 %v74
    %646 = vmatprep.subr.mxu0 0.0
    %647 = vmatpush1.msra.mxu0 %v75
    %648 = vmatprep.subr.mxu0 0.0
    %649 = vmatpush1.msra.mxu0 %v76
    %650 = vmatprep.subr.mxu0 0.0
    %651 = vmatpush1.msra.mxu0 %v77
    %652 = vmatprep.subr.mxu0 0.0
    %653 = vmatpush1.msra.mxu0 %v78
    %654 = vmatprep.subr.mxu0 0.0
    %655 = vmatpush1.msra.mxu0 %v79
    %656 = vmatprep.subr.mxu0 0.0
    %657 = vmatpush1.msra.mxu0 %v80
    %658 = vmatprep.subr.mxu0 0.0
    %659 = vmatpush1.msra.mxu0 %v81
    %660 = vmatprep.subr.mxu0 0.0
    %661 = vmatpush1.msra.mxu0 %v82
    %662 = vmatprep.subr.mxu0 0.0
    %663 = vmatpush1.msra.mxu0 %v83
    %664 = vmatprep.subr.mxu0 0.0
    %665 = vmatpush1.msra.mxu0 %v84
    %666 = vmatprep.subr.mxu0 0.0
    %667 = vmatpush1.msra.mxu0 %v85
    %668 = vmatprep.subr.mxu0 0.0
    %669 = vmatpush1.msra.mxu0 %v86
    %670 = vmatprep.subr.mxu0 0.0
    %671 = vmatpush1.msra.mxu0 %v87
    %672 = vmatprep.subr.mxu0 0.0
    %673 = vmatpush1.msra.mxu0 %v88
    %674 = vmatprep.subr.mxu0 0.0
    %675 = vmatpush1.msra.mxu0 %v89
    %676 = vmatprep.subr.mxu0 0.0
    %677 = vmatpush1.msra.mxu0 %v90
    %678 = vmatprep.subr.mxu0 0.0
    %679 = vmatpush1.msra.mxu0 %v91
    %680 = vmatprep.subr.mxu0 0.0
    %681 = vmatpush1.msra.mxu0 %v92
    %682 = vmatprep.subr.mxu0 0.0
    %683 = vmatpush1.msra.mxu0 %v93
    %684 = vmatprep.subr.mxu0 0.0
    %685 = vmatpush1.msra.mxu0 %v94
    %686 = vmatprep.subr.mxu0 0.0
    %687 = vmatpush1.msra.mxu0 %v95
    %688 = vmatprep.subr.mxu0 0.0
    %689 = vmatpush1.msra.mxu0 %v96
    %690 = vmatprep.mubr.f32.mxu0 %v446
    %691 = vmatmul.mubr.f32.gmra.mrb[0].mxu0 %v444
    %v692 = vpop.f32.mrb[0].mxu0
    %v693 = vadd.f32 %v623, %v692
    %v694 = vpop.f32.mrb[0].mxu0
    %695 = vdwg.mxu0
    %696 = vmatprep.subr.mxu0 0.0
    %697 = vmatpush1.msra.mxu0 %v97
    %698 = vmatprep.subr.mxu0 0.0
    %699 = vmatpush1.msra.mxu0 %v98
    %700 = vmatprep.subr.mxu0 0.0
    %701 = vmatpush1.msra.mxu0 %v99
    %702 = vmatprep.subr.mxu0 0.0
    %703 = vmatpush1.msra.mxu0 %v100
    %704 = vmatprep.subr.mxu0 0.0
    %705 = vmatpush1.msra.mxu0 %v101
    %706 = vmatprep.subr.mxu0 0.0
    %707 = vmatpush1.msra.mxu0 %v102
    %708 = vmatprep.subr.mxu0 0.0
    %709 = vmatpush1.msra.mxu0 %v103
    %710 = vmatprep.subr.mxu0 0.0
    %711 = vmatpush1.msra.mxu0 %v104
    %712 = vmatprep.subr.mxu0 0.0
    %713 = vmatpush1.msra.mxu0 %v105
    %714 = vmatprep.subr.mxu0 0.0
    %715 = vmatpush1.msra.mxu0 %v106
    %716 = vmatprep.subr.mxu0 0.0
    %717 = vmatpush1.msra.mxu0 %v107
    %718 = vmatprep.subr.mxu0 0.0
    %719 = vmatpush1.msra.mxu0 %v108
    %720 = vmatprep.subr.mxu0 0.0
    %721 = vmatpush1.msra.mxu0 %v109
    %722 = vmatprep.subr.mxu0 0.0
    %723 = vmatpush1.msra.mxu0 %v110
    %724 = vmatprep.subr.mxu0 0.0
    %725 = vmatpush1.msra.mxu0 %v111
    %726 = vmatprep.subr.mxu0 0.0
    %727 = vmatpush1.msra.mxu0 %v112
    %728 = vmatprep.subr.mxu0 0.0
    %729 = vmatpush1.msra.mxu0 %v113
    %730 = vmatprep.subr.mxu0 0.0
    %731 = vmatpush1.msra.mxu0 %v114
    %732 = vmatprep.subr.mxu0 0.0
    %733 = vmatpush1.msra.mxu0 %v115
    %734 = vmatprep.subr.mxu0 0.0
    %735 = vmatpush1.msra.mxu0 %v116
    %736 = vmatprep.subr.mxu0 0.0
    %737 = vmatpush1.msra.mxu0 %v117
    %738 = vmatprep.subr.mxu0 0.0
    %739 = vmatpush1.msra.mxu0 %v118
    %740 = vmatprep.subr.mxu0 0.0
    %741 = vmatpush1.msra.mxu0 %v119
    %742 = vmatprep.subr.mxu0 0.0
    %743 = vmatpush1.msra.mxu0 %v120
    %744 = vmatprep.subr.mxu0 0.0
    %745 = vmatpush1.msra.mxu0 %v121
    %746 = vmatprep.subr.mxu0 0.0
    %747 = vmatpush1.msra.mxu0 %v122
    %748 = vmatprep.subr.mxu0 0.0
    %749 = vmatpush1.msra.mxu0 %v123
    %750 = vmatprep.subr.mxu0 0.0
    %751 = vmatpush1.msra.mxu0 %v124
    %752 = vmatprep.subr.mxu0 0.0
    %753 = vmatpush1.msra.mxu0 %v125
    %754 = vmatprep.subr.mxu0 0.0
    %755 = vmatpush1.msra.mxu0 %v126
    %756 = vmatprep.subr.mxu0 0.0
    %757 = vmatpush1.msra.mxu0 %v127
    %758 = vmatprep.subr.mxu0 0.0
    %759 = vmatpush1.msra.mxu0 %v128
    %760 = vmatprep.mubr.f32.mxu0 %v462
    %761 = vmatmul.mubr.f32.gmra.mrb[0].mxu0 %v454
    %v762 = vpop.f32.mrb[0].mxu0
    %v763 = vadd.f32 %v693, %v762
    %v764 = vpop.f32.mrb[0].mxu0
    %765 = vdwg.mxu0
    %766 = vmatprep.subr.mxu0 0.0
    %767 = vmatpush1.msra.mxu0 %v129
    %768 = vmatprep.subr.mxu0 0.0
    %769 = vmatpush1.msra.mxu0 %v130
    %770 = vmatprep.subr.mxu0 0.0
    %771 = vmatpush1.msra.mxu0 %v131
    %772 = vmatprep.subr.mxu0 0.0
    %773 = vmatpush1.msra.mxu0 %v132
    %774 = vmatprep.subr.mxu0 0.0
    %775 = vmatpush1.msra.mxu0 %v133
    %776 = vmatprep.subr.mxu0 0.0
    %777 = vmatpush1.msra.mxu0 %v134
    %778 = vmatprep.subr.mxu0 0.0
    %779 = vmatpush1.msra.mxu0 %v135
    %780 = vmatprep.subr.mxu0 0.0
    %781 = vmatpush1.msra.mxu0 %v136
    %782 = vmatprep.subr.mxu0 0.0
    %783 = vmatpush1.msra.mxu0 %v137
    %784 = vmatprep.subr.mxu0 0.0
    %785 = vmatpush1.msra.mxu0 %v138
    %786 = vmatprep.subr.mxu0 0.0
    %787 = vmatpush1.msra.mxu0 %v139
    %788 = vmatprep.subr.mxu0 0.0
    %789 = vmatpush1.msra.mxu0 %v140
    %790 = vmatprep.subr.mxu0 0.0
    %791 = vmatpush1.msra.mxu0 %v141
    %792 = vmatprep.subr.mxu0 0.0
    %793 = vmatpush1.msra.mxu0 %v142
    %794 = vmatprep.subr.mxu0 0.0
    %795 = vmatpush1.msra.mxu0 %v143
    %796 = vmatprep.subr.mxu0 0.0
    %797 = vmatpush1.msra.mxu0 %v144
    %798 = vmatprep.subr.mxu0 0.0
    %799 = vmatpush1.msra.mxu0 %v145
    %800 = vmatprep.subr.mxu0 0.0
    %801 = vmatpush1.msra.mxu0 %v146
    %802 = vmatprep.subr.mxu0 0.0
    %803 = vmatpush1.msra.mxu0 %v147
    %804 = vmatprep.subr.mxu0 0.0
    %805 = vmatpush1.msra.mxu0 %v148
    %806 = vmatprep.subr.mxu0 0.0
    %807 = vmatpush1.msra.mxu0 %v149
    %808 = vmatprep.subr.mxu0 0.0
    %809 = vmatpush1.msra.mxu0 %v150
    %810 = vmatprep.subr.mxu0 0.0
    %811 = vmatpush1.msra.mxu0 %v151
    %812 = vmatprep.subr.mxu0 0.0
    %813 = vmatpush1.msra.mxu0 %v152
    %814 = vmatprep.subr.mxu0 0.0
    %815 = vmatpush1.msra.mxu0 %v153
    %816 = vmatprep.subr.mxu0 0.0
    %817 = vmatpush1.msra.mxu0 %v154
    %818 = vmatprep.subr.mxu0 0.0
    %819 = vmatpush1.msra.mxu0 %v155
    %820 = vmatprep.subr.mxu0 0.0
    %821 = vmatpush1.msra.mxu0 %v156
    %822 = vmatprep.subr.mxu0 0.0
    %823 = vmatpush1.msra.mxu0 %v157
    %824 = vmatprep.subr.mxu0 0.0
    %825 = vmatpush1.msra.mxu0 %v158
    %826 = vmatprep.subr.mxu0 0.0
    %827 = vmatpush1.msra.mxu0 %v159
    %828 = vmatprep.subr.mxu0 0.0
    %829 = vmatpush1.msra.mxu0 %v160
    %830 = vmatprep.mubr.f32.mxu0 %v463
    %831 = vmatmul.mubr.f32.gmra.mrb[0].mxu0 %v461
    %v832 = vpop.f32.mrb[0].mxu0
    %v833 = vadd.f32 %v763, %v832
    %v834 = vpop.f32.mrb[0].mxu0
    %835 = vdwg.mxu0
    %836 = vmatprep.subr.mxu0 0.0
    %837 = vmatpush1.msra.mxu0 %v161
    %838 = vmatprep.subr.mxu0 0.0
    %839 = vmatpush1.msra.mxu0 %v162
    %840 = vmatprep.subr.mxu0 0.0
    %841 = vmatpush1.msra.mxu0 %v163
    %842 = vmatprep.subr.mxu0 0.0
    %843 = vmatpush1.msra.mxu0 %v164
    %844 = vmatprep.subr.mxu0 0.0
    %845 = vmatpush1.msra.mxu0 %v165
    %846 = vmatprep.subr.mxu0 0.0
    %847 = vmatpush1.msra.mxu0 %v166
    %848 = vmatprep.subr.mxu0 0.0
    %849 = vmatpush1.msra.mxu0 %v167
    %850 = vmatprep.subr.mxu0 0.0
    %851 = vmatpush1.msra.mxu0 %v168
    %852 = vmatprep.subr.mxu0 0.0
    %853 = vmatpush1.msra.mxu0 %v169
    %854 = vmatprep.subr.mxu0 0.0
    %855 = vmatpush1.msra.mxu0 %v170
    %856 = vmatprep.subr.mxu0 0.0
    %857 = vmatpush1.msra.mxu0 %v171
    %858 = vmatprep.subr.mxu0 0.0
    %859 = vmatpush1.msra.mxu0 %v172
    %860 = vmatprep.subr.mxu0 0.0
    %861 = vmatpush1.msra.mxu0 %v173
    %862 = vmatprep.subr.mxu0 0.0
    %863 = vmatpush1.msra.mxu0 %v174
    %864 = vmatprep.subr.mxu0 0.0
    %865 = vmatpush1.msra.mxu0 %v175
    %866 = vmatprep.subr.mxu0 0.0
    %867 = vmatpush1.msra.mxu0 %v176
    %868 = vmatprep.subr.mxu0 0.0
    %869 = vmatpush1.msra.mxu0 %v177
    %870 = vmatprep.subr.mxu0 0.0
    %871 = vmatpush1.msra.mxu0 %v178
    %872 = vmatprep.subr.mxu0 0.0
    %873 = vmatpush1.msra.mxu0 %v179
    %874 = vmatprep.subr.mxu0 0.0
    %875 = vmatpush1.msra.mxu0 %v180
    %876 = vmatprep.subr.mxu0 0.0
    %877 = vmatpush1.msra.mxu0 %v181
    %878 = vmatprep.subr.mxu0 0.0
    %879 = vmatpush1.msra.mxu0 %v182
    %880 = vmatprep.subr.mxu0 0.0
    %881 = vmatpush1.msra.mxu0 %v183
    %882 = vmatprep.subr.mxu0 0.0
    %883 = vmatpush1.msra.mxu0 %v184
    %884 = vmatprep.subr.mxu0 0.0
    %885 = vmatpush1.msra.mxu0 %v185
    %886 = vmatprep.subr.mxu0 0.0
    %887 = vmatpush1.msra.mxu0 %v186
    %888 = vmatprep.subr.mxu0 0.0
    %889 = vmatpush1.msra.mxu0 %v187
    %890 = vmatprep.subr.mxu0 0.0
    %891 = vmatpush1.msra.mxu0 %v188
    %892 = vmatprep.subr.mxu0 0.0
    %893 = vmatpush1.msra.mxu0 %v189
    %894 = vmatprep.subr.mxu0 0.0
    %895 = vmatpush1.msra.mxu0 %v190
    %896 = vmatprep.subr.mxu0 0.0
    %897 = vmatpush1.msra.mxu0 %v191
    %898 = vmatprep.subr.mxu0 0.0
    %899 = vmatpush1.msra.mxu0 %v192
    %900 = vmatprep.mubr.f32.mxu0 %v479
    %901 = vmatmul.mubr.f32.gmra.mrb[0].mxu0 %v471
    %v902 = vpop.f32.mrb[0].mxu0
    %v903 = vadd.f32 %v833, %v902
    %v904 = vpop.f32.mrb[0].mxu0
    %905 = vdwg.mxu0
    %906 = vmatprep.subr.mxu0 0.0
    %907 = vmatpush1.msra.mxu0 %v193
    %908 = vmatprep.subr.mxu0 0.0
    %909 = vmatpush1.msra.mxu0 %v194
    %910 = vmatprep.subr.mxu0 0.0
    %911 = vmatpush1.msra.mxu0 %v195
    %912 = vmatprep.subr.mxu0 0.0
    %913 = vmatpush1.msra.mxu0 %v196
    %914 = vmatprep.subr.mxu0 0.0
    %915 = vmatpush1.msra.mxu0 %v197
    %916 = vmatprep.subr.mxu0 0.0
    %917 = vmatpush1.msra.mxu0 %v198
    %918 = vmatprep.subr.mxu0 0.0
    %919 = vmatpush1.msra.mxu0 %v199
    %920 = vmatprep.subr.mxu0 0.0
    %921 = vmatpush1.msra.mxu0 %v200
    %922 = vmatprep.subr.mxu0 0.0
    %923 = vmatpush1.msra.mxu0 %v201
    %924 = vmatprep.subr.mxu0 0.0
    %925 = vmatpush1.msra.mxu0 %v202
    %926 = vmatprep.subr.mxu0 0.0
    %927 = vmatpush1.msra.mxu0 %v203
    %928 = vmatprep.subr.mxu0 0.0
    %929 = vmatpush1.msra.mxu0 %v204
    %930 = vmatprep.subr.mxu0 0.0
    %931 = vmatpush1.msra.mxu0 %v205
    %932 = vmatprep.subr.mxu0 0.0
    %933 = vmatpush1.msra.mxu0 %v206
    %934 = vmatprep.subr.mxu0 0.0
    %935 = vmatpush1.msra.mxu0 %v207
    %936 = vmatprep.subr.mxu0 0.0
    %937 = vmatpush1.msra.mxu0 %v208
    %938 = vmatprep.subr.mxu0 0.0
    %939 = vmatpush1.msra.mxu0 %v209
    %940 = vmatprep.subr.mxu0 0.0
    %941 = vmatpush1.msra.mxu0 %v210
    %942 = vmatprep.subr.mxu0 0.0
    %943 = vmatpush1.msra.mxu0 %v211
    %944 = vmatprep.subr.mxu0 0.0
    %945 = vmatpush1.msra.mxu0 %v212
    %946 = vmatprep.subr.mxu0 0.0
    %947 = vmatpush1.msra.mxu0 %v213
    %948 = vmatprep.subr.mxu0 0.0
    %949 = vmatpush1.msra.mxu0 %v214
    %950 = vmatprep.subr.mxu0 0.0
    %951 = vmatpush1.msra.mxu0 %v215
    %952 = vmatprep.subr.mxu0 0.0
    %953 = vmatpush1.msra.mxu0 %v216
    %954 = vmatprep.subr.mxu0 0.0
    %955 = vmatpush1.msra.mxu0 %v217
    %956 = vmatprep.subr.mxu0 0.0
    %957 = vmatpush1.msra.mxu0 %v218
    %958 = vmatprep.subr.mxu0 0.0
    %959 = vmatpush1.msra.mxu0 %v219
    %960 = vmatprep.subr.mxu0 0.0
    %961 = vmatpush1.msra.mxu0 %v220
    %962 = vmatprep.subr.mxu0 0.0
    %963 = vmatpush1.msra.mxu0 %v221
    %964 = vmatprep.subr.mxu0 0.0
    %965 = vmatpush1.msra.mxu0 %v222
    %966 = vmatprep.subr.mxu0 0.0
    %967 = vmatpush1.msra.mxu0 %v223
    %968 = vmatprep.subr.mxu0 0.0
    %969 = vmatpush1.msra.mxu0 %v224
    %970 = vmatprep.mubr.f32.mxu0 %v480
    %971 = vmatmul.mubr.f32.gmra.mrb[0].mxu0 %v478
    %v972 = vpop.f32.mrb[0].mxu0
    %v973 = vadd.f32 %v903, %v972
    %v974 = vpop.f32.mrb[0].mxu0
    %975 = vdwg.mxu0
    %976 = vmatprep.subr.mxu0 0.0
    %977 = vmatpush1.msra.mxu0 %v225
    %978 = vmatprep.subr.mxu0 0.0
    %979 = vmatpush1.msra.mxu0 %v226
    %980 = vmatprep.subr.mxu0 0.0
    %981 = vmatpush1.msra.mxu0 %v227
    %982 = vmatprep.subr.mxu0 0.0
    %983 = vmatpush1.msra.mxu0 %v228
    %984 = vmatprep.subr.mxu0 0.0
    %985 = vmatpush1.msra.mxu0 %v229
    %986 = vmatprep.subr.mxu0 0.0
    %987 = vmatpush1.msra.mxu0 %v230
    %988 = vmatprep.subr.mxu0 0.0
    %989 = vmatpush1.msra.mxu0 %v231
    %990 = vmatprep.subr.mxu0 0.0
    %991 = vmatpush1.msra.mxu0 %v232
    %992 = vmatprep.subr.mxu0 0.0
    %993 = vmatpush1.msra.mxu0 %v233
    %994 = vmatprep.subr.mxu0 0.0
    %995 = vmatpush1.msra.mxu0 %v234
    %996 = vmatprep.subr.mxu0 0.0
    %997 = vmatpush1.msra.mxu0 %v235
    %998 = vmatprep.subr.mxu0 0.0
    %999 = vmatpush1.msra.mxu0 %v236
    %1000 = vmatprep.subr.mxu0 0.0
    %1001 = vmatpush1.msra.mxu0 %v237
    %1002 = vmatprep.subr.mxu0 0.0
    %1003 = vmatpush1.msra.mxu0 %v238
    %1004 = vmatprep.subr.mxu0 0.0
    %1005 = vmatpush1.msra.mxu0 %v239
    %1006 = vmatprep.subr.mxu0 0.0
    %1007 = vmatpush1.msra.mxu0 %v240
    %1008 = vmatprep.subr.mxu0 0.0
    %1009 = vmatpush1.msra.mxu0 %v241
    %1010 = vmatprep.subr.mxu0 0.0
    %1011 = vmatpush1.msra.mxu0 %v242
    %1012 = vmatprep.subr.mxu0 0.0
    %1013 = vmatpush1.msra.mxu0 %v243
    %1014 = vmatprep.subr.mxu0 0.0
    %1015 = vmatpush1.msra.mxu0 %v244
    %1016 = vmatprep.subr.mxu0 0.0
    %1017 = vmatpush1.msra.mxu0 %v245
    %1018 = vmatprep.subr.mxu0 0.0
    %1019 = vmatpush1.msra.mxu0 %v246
    %1020 = vmatprep.subr.mxu0 0.0
    %1021 = vmatpush1.msra.mxu0 %v247
    %1022 = vmatprep.subr.mxu0 0.0
    %1023 = vmatpush1.msra.mxu0 %v248
    %1024 = vmatprep.subr.mxu0 0.0
    %1025 = vmatpush1.msra.mxu0 %v249
    %1026 = vmatprep.subr.mxu0 0.0
    %1027 = vmatpush1.msra.mxu0 %v250
    %1028 = vmatprep.subr.mxu0 0.0
    %1029 = vmatpush1.msra.mxu0 %v251
    %1030 = vmatprep.subr.mxu0 0.0
    %1031 = vmatpush1.msra.mxu0 %v252
    %1032 = vmatprep.subr.mxu0 0.0
    %1033 = vmatpush1.msra.mxu0 %v253
    %1034 = vmatprep.subr.mxu0 0.0
    %1035 = vmatpush1.msra.mxu0 %v254
    %1036 = vmatprep.subr.mxu0 0.0
    %1037 = vmatpush1.msra.mxu0 %v255
    %1038 = vmatprep.subr.mxu0 0.0
    %1039 = vmatpush1.msra.mxu0 %v256
    %1040 = vmatprep.mubr.f32.mxu0 %v496
    %1041 = vmatmul.mubr.f32.gmra.mrb[0].mxu0 %v488
    %v1042 = vpop.f32.mrb[0].mxu0
    %v1043 = vadd.f32 %v973, %v1042
    %v1044 = vpop.f32.mrb[0].mxu0
    %1045 = vdwg.mxu0
    %1046 = vmatprep.subr.mxu0 0.0
    %1047 = vmatpush1.msra.mxu0 %v257
    %1048 = vmatprep.subr.mxu0 0.0
    %1049 = vmatpush1.msra.mxu0 %v258
    %1050 = vmatprep.subr.mxu0 0.0
    %1051 = vmatpush1.msra.mxu0 %v259
    %1052 = vmatprep.subr.mxu0 0.0
    %1053 = vmatpush1.msra.mxu0 %v260
    %1054 = vmatprep.subr.mxu0 0.0
    %1055 = vmatpush1.msra.mxu0 %v261
    %1056 = vmatprep.subr.mxu0 0.0
    %1057 = vmatpush1.msra.mxu0 %v262
    %1058 = vmatprep.subr.mxu0 0.0
    %1059 = vmatpush1.msra.mxu0 %v263
    %1060 = vmatprep.subr.mxu0 0.0
    %1061 = vmatpush1.msra.mxu0 %v264
    %1062 = vmatprep.subr.mxu0 0.0
    %1063 = vmatpush1.msra.mxu0 %v265
    %1064 = vmatprep.subr.mxu0 0.0
    %1065 = vmatpush1.msra.mxu0 %v266
    %1066 = vmatprep.subr.mxu0 0.0
    %1067 = vmatpush1.msra.mxu0 %v267
    %1068 = vmatprep.subr.mxu0 0.0
    %1069 = vmatpush1.msra.mxu0 %v268
    %1070 = vmatprep.subr.mxu0 0.0
    %1071 = vmatpush1.msra.mxu0 %v269
    %1072 = vmatprep.subr.mxu0 0.0
    %1073 = vmatpush1.msra.mxu0 %v270
    %1074 = vmatprep.subr.mxu0 0.0
    %1075 = vmatpush1.msra.mxu0 %v271
    %1076 = vmatprep.subr.mxu0 0.0
    %1077 = vmatpush1.msra.mxu0 %v272
    %1078 = vmatprep.subr.mxu0 0.0
    %1079 = vmatpush1.msra.mxu0 %v273
    %1080 = vmatprep.subr.mxu0 0.0
    %1081 = vmatpush1.msra.mxu0 %v274
    %1082 = vmatprep.subr.mxu0 0.0
    %1083 = vmatpush1.msra.mxu0 %v275
    %1084 = vmatprep.subr.mxu0 0.0
    %1085 = vmatpush1.msra.mxu0 %v276
    %1086 = vmatprep.subr.mxu0 0.0
    %1087 = vmatpush1.msra.mxu0 %v277
    %1088 = vmatprep.subr.mxu0 0.0
    %1089 = vmatpush1.msra.mxu0 %v278
    %1090 = vmatprep.subr.mxu0 0.0
    %1091 = vmatpush1.msra.mxu0 %v279
    %1092 = vmatprep.subr.mxu0 0.0
    %1093 = vmatpush1.msra.mxu0 %v280
    %1094 = vmatprep.subr.mxu0 0.0
    %1095 = vmatpush1.msra.mxu0 %v281
    %1096 = vmatprep.subr.mxu0 0.0
    %1097 = vmatpush1.msra.mxu0 %v282
    %1098 = vmatprep.subr.mxu0 0.0
    %1099 = vmatpush1.msra.mxu0 %v283
    %1100 = vmatprep.subr.mxu0 0.0
    %1101 = vmatpush1.msra.mxu0 %v284
    %1102 = vmatprep.subr.mxu0 0.0
    %1103 = vmatpush1.msra.mxu0 %v285
    %1104 = vmatprep.subr.mxu0 0.0
    %1105 = vmatpush1.msra.mxu0 %v286
    %1106 = vmatprep.subr.mxu0 0.0
    %1107 = vmatpush1.msra.mxu0 %v287
    %1108 = vmatprep.subr.mxu0 0.0
    %1109 = vmatpush1.msra.mxu0 %v288
    %1110 = vmatprep.mubr.f32.mxu0 %v497
    %1111 = vmatmul.mubr.f32.gmra.mrb[0].mxu0 %v495
    %v1112 = vpop.f32.mrb[0].mxu0
    %v1113 = vadd.f32 %v1043, %v1112
    %v1114 = vpop.f32.mrb[0].mxu0
    %1115 = vdwg.mxu0
    %1116 = vmatprep.subr.mxu0 0.0
    %1117 = vmatpush1.msra.mxu0 %v289
    %1118 = vmatprep.subr.mxu0 0.0
    %1119 = vmatpush1.msra.mxu0 %v290
    %1120 = vmatprep.subr.mxu0 0.0
    %1121 = vmatpush1.msra.mxu0 %v291
    %1122 = vmatprep.subr.mxu0 0.0
    %1123 = vmatpush1.msra.mxu0 %v292
    %1124 = vmatprep.subr.mxu0 0.0
    %1125 = vmatpush1.msra.mxu0 %v293
    %1126 = vmatprep.subr.mxu0 0.0
    %1127 = vmatpush1.msra.mxu0 %v294
    %1128 = vmatprep.subr.mxu0 0.0
    %1129 = vmatpush1.msra.mxu0 %v295
    %1130 = vmatprep.subr.mxu0 0.0
    %1131 = vmatpush1.msra.mxu0 %v296
    %1132 = vmatprep.subr.mxu0 0.0
    %1133 = vmatpush1.msra.mxu0 %v297
    %1134 = vmatprep.subr.mxu0 0.0
    %1135 = vmatpush1.msra.mxu0 %v298
    %1136 = vmatprep.subr.mxu0 0.0
    %1137 = vmatpush1.msra.mxu0 %v299
    %1138 = vmatprep.subr.mxu0 0.0
    %1139 = vmatpush1.msra.mxu0 %v300
    %1140 = vmatprep.subr.mxu0 0.0
    %1141 = vmatpush1.msra.mxu0 %v301
    %1142 = vmatprep.subr.mxu0 0.0
    %1143 = vmatpush1.msra.mxu0 %v302
    %1144 = vmatprep.subr.mxu0 0.0
    %1145 = vmatpush1.msra.mxu0 %v303
    %1146 = vmatprep.subr.mxu0 0.0
    %1147 = vmatpush1.msra.mxu0 %v304
    %1148 = vmatprep.subr.mxu0 0.0
    %1149 = vmatpush1.msra.mxu0 %v305
    %1150 = vmatprep.subr.mxu0 0.0
    %1151 = vmatpush1.msra.mxu0 %v306
    %1152 = vmatprep.subr.mxu0 0.0
    %1153 = vmatpush1.msra.mxu0 %v307
    %1154 = vmatprep.subr.mxu0 0.0
    %1155 = vmatpush1.msra.mxu0 %v308
    %1156 = vmatprep.subr.mxu0 0.0
    %1157 = vmatpush1.msra.mxu0 %v309
    %1158 = vmatprep.subr.mxu0 0.0
    %1159 = vmatpush1.msra.mxu0 %v310
    %1160 = vmatprep.subr.mxu0 0.0
    %1161 = vmatpush1.msra.mxu0 %v311
    %1162 = vmatprep.subr.mxu0 0.0
    %1163 = vmatpush1.msra.mxu0 %v312
    %1164 = vmatprep.subr.mxu0 0.0
    %1165 = vmatpush1.msra.mxu0 %v313
    %1166 = vmatprep.subr.mxu0 0.0
    %1167 = vmatpush1.msra.mxu0 %v314
    %1168 = vmatprep.subr.mxu0 0.0
    %1169 = vmatpush1.msra.mxu0 %v315
    %1170 = vmatprep.subr.mxu0 0.0
    %1171 = vmatpush1.msra.mxu0 %v316
    %1172 = vmatprep.subr.mxu0 0.0
    %1173 = vmatpush1.msra.mxu0 %v317
    %1174 = vmatprep.subr.mxu0 0.0
    %1175 = vmatpush1.msra.mxu0 %v318
    %1176 = vmatprep.subr.mxu0 0.0
    %1177 = vmatpush1.msra.mxu0 %v319
    %1178 = vmatprep.subr.mxu0 0.0
    %1179 = vmatpush1.msra.mxu0 %v320
    %1180 = vmatprep.mubr.f32.mxu0 %v513
    %1181 = vmatmul.mubr.f32.gmra.mrb[0].mxu0 %v505
    %v1182 = vpop.f32.mrb[0].mxu0
    %v1183 = vadd.f32 %v1113, %v1182
    %v1184 = vpop.f32.mrb[0].mxu0
    %1185 = vdwg.mxu0
    %1186 = vmatprep.subr.mxu0 0.0
    %1187 = vmatpush1.msra.mxu0 %v321
    %1188 = vmatprep.subr.mxu0 0.0
    %1189 = vmatpush1.msra.mxu0 %v322
    %1190 = vmatprep.subr.mxu0 0.0
    %1191 = vmatpush1.msra.mxu0 %v323
    %1192 = vmatprep.subr.mxu0 0.0
    %1193 = vmatpush1.msra.mxu0 %v324
    %1194 = vmatprep.subr.mxu0 0.0
    %1195 = vmatpush1.msra.mxu0 %v325
    %1196 = vmatprep.subr.mxu0 0.0
    %1197 = vmatpush1.msra.mxu0 %v326
    %1198 = vmatprep.subr.mxu0 0.0
    %1199 = vmatpush1.msra.mxu0 %v327
    %1200 = vmatprep.subr.mxu0 0.0
    %1201 = vmatpush1.msra.mxu0 %v328
    %1202 = vmatprep.subr.mxu0 0.0
    %1203 = vmatpush1.msra.mxu0 %v329
    %1204 = vmatprep.subr.mxu0 0.0
    %1205 = vmatpush1.msra.mxu0 %v330
    %1206 = vmatprep.subr.mxu0 0.0
    %1207 = vmatpush1.msra.mxu0 %v331
    %1208 = vmatprep.subr.mxu0 0.0
    %1209 = vmatpush1.msra.mxu0 %v332
    %1210 = vmatprep.subr.mxu0 0.0
    %1211 = vmatpush1.msra.mxu0 %v333
    %1212 = vmatprep.subr.mxu0 0.0
    %1213 = vmatpush1.msra.mxu0 %v334
    %1214 = vmatprep.subr.mxu0 0.0
    %1215 = vmatpush1.msra.mxu0 %v335
    %1216 = vmatprep.subr.mxu0 0.0
    %1217 = vmatpush1.msra.mxu0 %v336
    %1218 = vmatprep.subr.mxu0 0.0
    %1219 = vmatpush1.msra.mxu0 %v337
    %1220 = vmatprep.subr.mxu0 0.0
    %1221 = vmatpush1.msra.mxu0 %v338
    %1222 = vmatprep.subr.mxu0 0.0
    %1223 = vmatpush1.msra.mxu0 %v339
    %1224 = vmatprep.subr.mxu0 0.0
    %1225 = vmatpush1.msra.mxu0 %v340
    %1226 = vmatprep.subr.mxu0 0.0
    %1227 = vmatpush1.msra.mxu0 %v341
    %1228 = vmatprep.subr.mxu0 0.0
    %1229 = vmatpush1.msra.mxu0 %v342
    %1230 = vmatprep.subr.mxu0 0.0
    %1231 = vmatpush1.msra.mxu0 %v343
    %1232 = vmatprep.subr.mxu0 0.0
    %1233 = vmatpush1.msra.mxu0 %v344
    %1234 = vmatprep.subr.mxu0 0.0
    %1235 = vmatpush1.msra.mxu0 %v345
    %1236 = vmatprep.subr.mxu0 0.0
    %1237 = vmatpush1.msra.mxu0 %v346
    %1238 = vmatprep.subr.mxu0 0.0
    %1239 = vmatpush1.msra.mxu0 %v347
    %1240 = vmatprep.subr.mxu0 0.0
    %1241 = vmatpush1.msra.mxu0 %v348
    %1242 = vmatprep.subr.mxu0 0.0
    %1243 = vmatpush1.msra.mxu0 %v349
    %1244 = vmatprep.subr.mxu0 0.0
    %1245 = vmatpush1.msra.mxu0 %v350
    %1246 = vmatprep.subr.mxu0 0.0
    %1247 = vmatpush1.msra.mxu0 %v351
    %1248 = vmatprep.subr.mxu0 0.0
    %1249 = vmatpush1.msra.mxu0 %v352
    %1250 = vmatprep.mubr.f32.mxu0 %v514
    %1251 = vmatmul.mubr.f32.gmra.mrb[0].mxu0 %v512
    %v1252 = vpop.f32.mrb[0].mxu0
    %v1253 = vadd.f32 %v1183, %v1252
    %v1254 = vpop.f32.mrb[0].mxu0
    %1255 = vdwg.mxu0
    %1256 = vmatprep.subr.mxu0 0.0
    %1257 = vmatpush1.msra.mxu0 %v353
    %1258 = vmatprep.subr.mxu0 0.0
    %1259 = vmatpush1.msra.mxu0 %v354
    %1260 = vmatprep.subr.mxu0 0.0
    %1261 = vmatpush1.msra.mxu0 %v355
    %1262 = vmatprep.subr.mxu0 0.0
    %1263 = vmatpush1.msra.mxu0 %v356
    %1264 = vmatprep.subr.mxu0 0.0
    %1265 = vmatpush1.msra.mxu0 %v357
    %1266 = vmatprep.subr.mxu0 0.0
    %1267 = vmatpush1.msra.mxu0 %v358
    %1268 = vmatprep.subr.mxu0 0.0
    %1269 = vmatpush1.msra.mxu0 %v359
    %1270 = vmatprep.subr.mxu0 0.0
    %1271 = vmatpush1.msra.mxu0 %v360
    %1272 = vmatprep.subr.mxu0 0.0
    %1273 = vmatpush1.msra.mxu0 %v361
    %1274 = vmatprep.subr.mxu0 0.0
    %1275 = vmatpush1.msra.mxu0 %v362
    %1276 = vmatprep.subr.mxu0 0.0
    %1277 = vmatpush1.msra.mxu0 %v363
    %1278 = vmatprep.subr.mxu0 0.0
    %1279 = vmatpush1.msra.mxu0 %v364
    %1280 = vmatprep.subr.mxu0 0.0
    %1281 = vmatpush1.msra.mxu0 %v365
    %1282 = vmatprep.subr.mxu0 0.0
    %1283 = vmatpush1.msra.mxu0 %v366
    %1284 = vmatprep.subr.mxu0 0.0
    %1285 = vmatpush1.msra.mxu0 %v367
    %1286 = vmatprep.subr.mxu0 0.0
    %1287 = vmatpush1.msra.mxu0 %v368
    %1288 = vmatprep.subr.mxu0 0.0
    %1289 = vmatpush1.msra.mxu0 %v369
    %1290 = vmatprep.subr.mxu0 0.0
    %1291 = vmatpush1.msra.mxu0 %v370
    %1292 = vmatprep.subr.mxu0 0.0
    %1293 = vmatpush1.msra.mxu0 %v371
    %1294 = vmatprep.subr.mxu0 0.0
    %1295 = vmatpush1.msra.mxu0 %v372
    %1296 = vmatprep.subr.mxu0 0.0
    %1297 = vmatpush1.msra.mxu0 %v373
    %1298 = vmatprep.subr.mxu0 0.0
    %1299 = vmatpush1.msra.mxu0 %v374
    %1300 = vmatprep.subr.mxu0 0.0
    %1301 = vmatpush1.msra.mxu0 %v375
    %1302 = vmatprep.subr.mxu0 0.0
    %1303 = vmatpush1.msra.mxu0 %v376
    %1304 = vmatprep.subr.mxu0 0.0
    %1305 = vmatpush1.msra.mxu0 %v377
    %1306 = vmatprep.subr.mxu0 0.0
    %1307 = vmatpush1.msra.mxu0 %v378
    %1308 = vmatprep.subr.mxu0 0.0
    %1309 = vmatpush1.msra.mxu0 %v379
    %1310 = vmatprep.subr.mxu0 0.0
    %1311 = vmatpush1.msra.mxu0 %v380
    %1312 = vmatprep.subr.mxu0 0.0
    %1313 = vmatpush1.msra.mxu0 %v381
    %1314 = vmatprep.subr.mxu0 0.0
    %1315 = vmatpush1.msra.mxu0 %v382
    %1316 = vmatprep.subr.mxu0 0.0
    %1317 = vmatpush1.msra.mxu0 %v383
    %1318 = vmatprep.subr.mxu0 0.0
    %1319 = vmatpush1.msra.mxu0 %v384
    %1320 = vmatprep.mubr.f32.mxu0 %v530
    %1321 = vmatmul.mubr.f32.gmra.mrb[0].mxu0 %v522
    %v1322 = vpop.f32.mrb[0].mxu0
    %v1323 = vadd.f32 %v1253, %v1322
    %v1324 = vpop.f32.mrb[0].mxu0
    %1325 = vdwg.mxu0
    %1326 = vmatprep.subr.mxu0 0.0
    %1327 = vmatpush1.msra.mxu0 %v385
    %1328 = vmatprep.subr.mxu0 0.0
    %1329 = vmatpush1.msra.mxu0 %v386
    %1330 = vmatprep.subr.mxu0 0.0
    %1331 = vmatpush1.msra.mxu0 %v387
    %1332 = vmatprep.subr.mxu0 0.0
    %1333 = vmatpush1.msra.mxu0 %v388
    %1334 = vmatprep.subr.mxu0 0.0
    %1335 = vmatpush1.msra.mxu0 %v389
    %1336 = vmatprep.subr.mxu0 0.0
    %1337 = vmatpush1.msra.mxu0 %v390
    %1338 = vmatprep.subr.mxu0 0.0
    %1339 = vmatpush1.msra.mxu0 %v391
    %1340 = vmatprep.subr.mxu0 0.0
    %1341 = vmatpush1.msra.mxu0 %v392
    %1342 = vmatprep.subr.mxu0 0.0
    %1343 = vmatpush1.msra.mxu0 %v393
    %1344 = vmatprep.subr.mxu0 0.0
    %1345 = vmatpush1.msra.mxu0 %v394
    %1346 = vmatprep.subr.mxu0 0.0
    %1347 = vmatpush1.msra.mxu0 %v395
    %1348 = vmatprep.subr.mxu0 0.0
    %1349 = vmatpush1.msra.mxu0 %v396
    %1350 = vmatprep.subr.mxu0 0.0
    %1351 = vmatpush1.msra.mxu0 %v397
    %1352 = vmatprep.subr.mxu0 0.0
    %1353 = vmatpush1.msra.mxu0 %v398
    %1354 = vmatprep.subr.mxu0 0.0
    %1355 = vmatpush1.msra.mxu0 %v399
    %1356 = vmatprep.subr.mxu0 0.0
    %1357 = vmatpush1.msra.mxu0 %v400
    %1358 = vmatprep.subr.mxu0 0.0
    %1359 = vmatpush1.msra.mxu0 %v401
    %1360 = vmatprep.subr.mxu0 0.0
    %1361 = vmatpush1.msra.mxu0 %v402
    %1362 = vmatprep.subr.mxu0 0.0
    %1363 = vmatpush1.msra.mxu0 %v403
    %1364 = vmatprep.subr.mxu0 0.0
    %1365 = vmatpush1.msra.mxu0 %v404
    %1366 = vmatprep.subr.mxu0 0.0
    %1367 = vmatpush1.msra.mxu0 %v405
    %1368 = vmatprep.subr.mxu0 0.0
    %1369 = vmatpush1.msra.mxu0 %v406
    %1370 = vmatprep.subr.mxu0 0.0
    %1371 = vmatpush1.msra.mxu0 %v407
    %1372 = vmatprep.subr.mxu0 0.0
    %1373 = vmatpush1.msra.mxu0 %v408
    %1374 = vmatprep.subr.mxu0 0.0
    %1375 = vmatpush1.msra.mxu0 %v409
    %1376 = vmatprep.subr.mxu0 0.0
    %1377 = vmatpush1.msra.mxu0 %v410
    %1378 = vmatprep.subr.mxu0 0.0
    %1379 = vmatpush1.msra.mxu0 %v411
    %1380 = vmatprep.subr.mxu0 0.0
    %1381 = vmatpush1.msra.mxu0 %v412
    %1382 = vmatprep.subr.mxu0 0.0
    %1383 = vmatpush1.msra.mxu0 %v413
    %1384 = vmatprep.subr.mxu0 0.0
    %1385 = vmatpush1.msra.mxu0 %v414
    %1386 = vmatprep.subr.mxu0 0.0
    %1387 = vmatpush1.msra.mxu0 %v415
    %1388 = vmatprep.subr.mxu0 0.0
    %1389 = vmatpush1.msra.mxu0 %v416
    %1390 = vmatprep.mubr.f32.mxu0 %v531
    %1391 = vmatmul.mubr.f32.gmra.mrb[0].mxu0 %v529
    %v1392 = vpop.f32.mrb[0].mxu0
    %v1393 = vadd.f32 %v1323, %v1392
    %v1394 = vpop.f32.mrb[0].mxu0
    %1395 = vdwg.mxu0
    %v1396 = vld [vmem:[%s3] sm:$0xff]
    %v1397 = vld [vmem:[%s3 + $0x8] sm:$0xff]
    %v1398 = vld [vmem:[%s3 + $0x10] sm:$0xff]
    %v1399 = vld [vmem:[%s3 + $0x18] sm:$0xff]
    %v1400 = vld [vmem:[%s4] sm:$0x1]
    %v1402 = vlaneseq
    %v1403 = vshrl.u32 %v1402, 7
    %v1404 = vsub.s32 0, %v1403
    %v1405 = vrot.slane %v1400, %v1404
    %vm1407 = vcmask 261120
    %v1409 = vsel %vm1407, %v1393, 0
    %1411 = vmatprep.subr.mxu0 0.0
    %1412 = vmatpush1.msra.mxu0 %v1396
    %1413 = vmatprep.subr.mxu0 0.0
    %1414 = vmatpush1.msra.mxu0 %v1397
    %1415 = vmatprep.subr.mxu0 0.0
    %1416 = vmatpush1.msra.mxu0 %v1398
    %1417 = vmatprep.subr.mxu0 0.0
    %1418 = vmatpush1.msra.mxu0 %v1399
    %1419 = vmatprep.subr.mxu0 0.0
    %1420 = vmatpush1.msra.mxu0 0.0
    %1421 = vmatprep.subr.mxu0 0.0
    %1422 = vmatpush1.msra.mxu0 0.0
    %1423 = vmatprep.subr.mxu0 0.0
    %1424 = vmatpush1.msra.mxu0 0.0
    %1425 = vmatprep.subr.mxu0 0.0
    %1426 = vmatpush1.msra.mxu0 0.0
    %1427 = vmatprep.subr.mxu0 0.0
    %1428 = vmatpush1.msra.mxu0 0.0
    %1429 = vmatprep.subr.mxu0 0.0
    %1430 = vmatpush1.msra.mxu0 0.0
    %1431 = vmatprep.subr.mxu0 0.0
    %1432 = vmatpush1.msra.mxu0 0.0
    %1433 = vmatprep.subr.mxu0 0.0
    %1434 = vmatpush1.msra.mxu0 0.0
    %1435 = vmatprep.subr.mxu0 0.0
    %1436 = vmatpush1.msra.mxu0 0.0
    %1437 = vmatprep.subr.mxu0 0.0
    %1438 = vmatpush1.msra.mxu0 0.0
    %1439 = vmatprep.subr.mxu0 0.0
    %1440 = vmatpush1.msra.mxu0 0.0
    %1441 = vmatprep.subr.mxu0 0.0
    %1442 = vmatpush1.msra.mxu0 0.0
    %1443 = vmatprep.subr.mxu0 0.0
    %1444 = vmatpush1.msra.mxu0 0.0
    %1445 = vmatprep.subr.mxu0 0.0
    %1446 = vmatpush1.msra.mxu0 0.0
    %1447 = vmatprep.subr.mxu0 0.0
    %1448 = vmatpush1.msra.mxu0 0.0
    %1449 = vmatprep.subr.mxu0 0.0
    %1450 = vmatpush1.msra.mxu0 0.0
    %1451 = vmatprep.subr.mxu0 0.0
    %1452 = vmatpush1.msra.mxu0 0.0
    %1453 = vmatprep.subr.mxu0 0.0
    %1454 = vmatpush1.msra.mxu0 0.0
    %1455 = vmatprep.subr.mxu0 0.0
    %1456 = vmatpush1.msra.mxu0 0.0
    %1457 = vmatprep.subr.mxu0 0.0
    %1458 = vmatpush1.msra.mxu0 0.0
    %1459 = vmatprep.subr.mxu0 0.0
    %1460 = vmatpush1.msra.mxu0 0.0
    %1461 = vmatprep.subr.mxu0 0.0
    %1462 = vmatpush1.msra.mxu0 0.0
    %1463 = vmatprep.subr.mxu0 0.0
    %1464 = vmatpush1.msra.mxu0 0.0
    %1465 = vmatprep.subr.mxu0 0.0
    %1466 = vmatpush1.msra.mxu0 0.0
    %1467 = vmatprep.subr.mxu0 0.0
    %1468 = vmatpush1.msra.mxu0 0.0
    %1469 = vmatprep.subr.mxu0 0.0
    %1470 = vmatpush1.msra.mxu0 0.0
    %1471 = vmatprep.subr.mxu0 0.0
    %1472 = vmatpush1.msra.mxu0 0.0
    %1473 = vmatprep.subr.mxu0 0.0
    %1474 = vmatpush1.msra.mxu0 0.0
    %1475 = vmatprep.mubr.f32.mxu0 0.0
    %1476 = vmatmul.mubr.f32.gmra.mrb[0].mxu0 %v1409
    %v1477 = vpop.f32.mrb[0].mxu0
    %v1478 = vadd.f32 %v1405, %v1477
    %v1479 = vpop.f32.mrb[0].mxu0
    %1480 = vdwg.mxu0
    %v1481 = vld [vmem:[%s5] sm:$0xff]
    %v1482 = vld [vmem:[%s5 + $0x8] sm:$0xff]
    %v1483 = vld [vmem:[%s5 + $0x10] sm:$0xff]
    %v1484 = vld [vmem:[%s6] sm:$0x1]
    %v1486 = vlaneseq
    %v1487 = vshrl.u32 %v1486, 7
    %v1488 = vsub.s32 0, %v1487
    %v1489 = vrot.slane %v1484, %v1488
    %vm1491 = vcmask 195584
    %v1493 = vsel %vm1491, %v1478, 0
    %1495 = vmatprep.subr.mxu0 0.0
    %1496 = vmatpush1.msra.mxu0 %v1481
    %1497 = vmatprep.subr.mxu0 0.0
    %1498 = vmatpush1.msra.mxu0 %v1482
    %1499 = vmatprep.subr.mxu0 0.0
    %1500 = vmatpush1.msra.mxu0 %v1483
    %1501 = vmatprep.subr.mxu0 0.0
    %1502 = vmatpush1.msra.mxu0 0.0
    %1503 = vmatprep.subr.mxu0 0.0
    %1504 = vmatpush1.msra.mxu0 0.0
    %1505 = vmatprep.subr.mxu0 0.0
    %1506 = vmatpush1.msra.mxu0 0.0
    %1507 = vmatprep.subr.mxu0 0.0
    %1508 = vmatpush1.msra.mxu0 0.0
    %1509 = vmatprep.subr.mxu0 0.0
    %1510 = vmatpush1.msra.mxu0 0.0
    %1511 = vmatprep.subr.mxu0 0.0
    %1512 = vmatpush1.msra.mxu0 0.0
    %1513 = vmatprep.subr.mxu0 0.0
    %1514 = vmatpush1.msra.mxu0 0.0
    %1515 = vmatprep.subr.mxu0 0.0
    %1516 = vmatpush1.msra.mxu0 0.0
    %1517 = vmatprep.subr.mxu0 0.0
    %1518 = vmatpush1.msra.mxu0 0.0
    %1519 = vmatprep.subr.mxu0 0.0
    %1520 = vmatpush1.msra.mxu0 0.0
    %1521 = vmatprep.subr.mxu0 0.0
    %1522 = vmatpush1.msra.mxu0 0.0
    %1523 = vmatprep.subr.mxu0 0.0
    %1524 = vmatpush1.msra.mxu0 0.0
    %1525 = vmatprep.subr.mxu0 0.0
    %1526 = vmatpush1.msra.mxu0 0.0
    %1527 = vmatprep.subr.mxu0 0.0
    %1528 = vmatpush1.msra.mxu0 0.0
    %1529 = vmatprep.subr.mxu0 0.0
    %1530 = vmatpush1.msra.mxu0 0.0
    %1531 = vmatprep.subr.mxu0 0.0
    %1532 = vmatpush1.msra.mxu0 0.0
    %1533 = vmatprep.subr.mxu0 0.0
    %1534 = vmatpush1.msra.mxu0 0.0
    %1535 = vmatprep.subr.mxu0 0.0
    %1536 = vmatpush1.msra.mxu0 0.0
    %1537 = vmatprep.subr.mxu0 0.0
    %1538 = vmatpush1.msra.mxu0 0.0
    %1539 = vmatprep.subr.mxu0 0.0
    %1540 = vmatpush1.msra.mxu0 0.0
    %1541 = vmatprep.subr.mxu0 0.0
    %1542 = vmatpush1.msra.mxu0 0.0
    %1543 = vmatprep.subr.mxu0 0.0
    %1544 = vmatpush1.msra.mxu0 0.0
    %1545 = vmatprep.subr.mxu0 0.0
    %1546 = vmatpush1.msra.mxu0 0.0
    %1547 = vmatprep.subr.mxu0 0.0
    %1548 = vmatpush1.msra.mxu0 0.0
    %1549 = vmatprep.subr.mxu0 0.0
    %1550 = vmatpush1.msra.mxu0 0.0
    %1551 = vmatprep.subr.mxu0 0.0
    %1552 = vmatpush1.msra.mxu0 0.0
    %1553 = vmatprep.subr.mxu0 0.0
    %1554 = vmatpush1.msra.mxu0 0.0
    %1555 = vmatprep.subr.mxu0 0.0
    %1556 = vmatpush1.msra.mxu0 0.0
    %1557 = vmatprep.subr.mxu0 0.0
    %1558 = vmatpush1.msra.mxu0 0.0
    %1559 = vmatprep.mubr.f32.mxu0 0.0
    %1560 = vmatmul.mubr.f32.gmra.mrb[0].mxu0 %v1493
    %v1561 = vpop.f32.mrb[0].mxu0
    %v1562 = vadd.f32 %v1489, %v1561
    %v1563 = vpop.f32.mrb[0].mxu0
    %1564 = vdwg.mxu0
    %vm1565 = vcmask 74752
    %1566 = vst.msk [vmem:[#allocation2] sm:$0x3] %vm1565, %v1562
    // Predicated region
    $region30: #{tpu_custom_call.1} parent=1 // pred_check
      _
    $region31: #{tpu_custom_call.1} parent=1 // pred_check_branch
      %1568 = sbr.rel (0) target = $region33
    $region32: #{tpu_custom_call.1} parent=1 // pred_region
      %s1570 = ssub.s32 32, 32
      %1571 = vsyncadd [#allocation3], %s1570
      %s1573 = sshll.u32 [#allocation2], 4
      %s1574 = int_to_ptr.vmem [resolvable:$true] %s1573
      %1576 = dma.vmem_to_hbm [thread:$0]  %s1574, 32, %s7, [#allocation3]
    $region33: #{tpu_custom_call.1} parent=1 // pred_fallthru
      _
    // Predicated region
    $region34: #{tpu_custom_call.1} parent=1 // pred_check
      _
    $region35: #{tpu_custom_call.1} parent=1 // pred_check_branch
      %1578 = sbr.rel (0) target = $region37
    $region36: #{tpu_custom_call.1} parent=1 // pred_region
      %1579 = dma.done [#allocation3], 32
    $region37: #{tpu_custom_call.1} parent=1 // pred_fallthru
      _
    %1580 = vsyncpa [#allocation3], 1

</llo_original>
